<compile_context>
chip_gen: v6e
topology: v6e:2x2x1
jax: 0.10.0
libtpu: 0.0.40
codegen_flags: <defaults>
</compile_context>

<pallas_src>
import jax
import jax.numpy as jnp
from jax.experimental import pallas as pl
from jax.experimental.pallas import tpu as pltpu

NUM_HEADS = 10


def critic_kernel(s_ref, a_ref, w1s_ref, w1a_ref, b1_ref,
                  w2_ref, b2_ref, w3_ref, b3_ref, q_ref):
    """All 10 Q-heads fused.

    s_ref  : (TB, S)        state block
    a_ref  : (TB, A)        action block
    w1s_ref: (S, 10H)  bf16 state rows of packed layer-1 weight
    w1a_ref: (A, 10H)  bf16 action rows of packed layer-1 weight
    b1_ref : (1, 10H)  f32
    w2_ref : (10, H, H) bf16 stacked (NOT block-diagonal) layer-2 weights
    b2_ref : (1, 10H)  f32
    w3_ref : (10H, 10) bf16 block-"diagonal" layer-3 weight
    b3_ref : (1, 10)   f32
    q_ref  : (TB, 10)  f32  column h is head h's Q value
    """
    nh, hdim, _ = w2_ref.shape
    cdt = w1s_ref.dtype  # MXU operand dtype (bf16 in production)

    # ---- Layer 1: [state|action] @ W1 == state @ W1_s + action @ W1_a ----
    h1 = (jnp.dot(s_ref[...].astype(cdt), w1s_ref[...],
                  preferred_element_type=jnp.float32)
          + jnp.dot(a_ref[...].astype(cdt), w1a_ref[...],
                    preferred_element_type=jnp.float32)
          + b1_ref[...])
    h1 = jnp.maximum(h1, 0.0).astype(cdt)                  # (TB, 10H)

    # ---- Layer 2: per-head (TB,H)@(H,H); w2 stays stacked, no block-diag ----
    h2_chunks = []
    for h in range(nh):                                    # static, 10 iters
        lo = h * hdim
        h2 = jnp.dot(h1[:, lo:lo + hdim], w2_ref[h],
                     preferred_element_type=jnp.float32)
        h2 = jnp.maximum(h2 + b2_ref[:, lo:lo + hdim], 0.0)
        h2_chunks.append(h2.astype(cdt))
    h2_all = jnp.concatenate(h2_chunks, axis=1)            # (TB, 10H)

    # ---- Layer 3: tiny packed projection -> lane-packed (TB, 10) output ----
    q = (jnp.dot(h2_all, w3_ref[...], preferred_element_type=jnp.float32)
         + b3_ref[...])
    q_ref[...] = q.astype(q_ref.dtype)


def critic_forward(state, action, packed_params, *, block_b=256):
    """Fused forward pass. Returns stacked (B, NUM_HEADS) f32 array
    (column h == q_{h+1} of the original module)."""
    w1s, w1a, b1, w2, b2, w3, b3 = packed_params
    B, S = state.shape
    A = action.shape[1]
    NH = NUM_HEADS
    H = w2.shape[1]
    NHH = NH * H

    # Batch tile: multiple of 8 when it divides B, else single full block.
    TB = block_b if (block_b <= B and B % block_b == 0) else B
    grid = (B // TB,)

    batch_map = lambda i: (i, 0)
    const2 = lambda i: (0, 0)
    const3 = lambda i: (0, 0, 0)

    def nbytes(x):
        return x.size * x.dtype.itemsize

    flops = 2 * B * NHH * (S + A) + 2 * B * NH * H * H + 2 * B * NHH * NH
    bytes_accessed = (nbytes(state) + nbytes(action) + B * NH * 4
                      + sum(nbytes(x) for x in packed_params))

    return pl.pallas_call(
        critic_kernel,
        out_shape=jax.ShapeDtypeStruct((B, NH), jnp.float32),
        grid=grid,
        in_specs=[
            pl.BlockSpec((TB, S), batch_map),          # state (blocked over B)
            pl.BlockSpec((TB, A), batch_map),          # action
            pl.BlockSpec(w1s.shape, const2),           # weights: constant
            pl.BlockSpec(w1a.shape, const2),           #   index_maps ->
            pl.BlockSpec(b1.shape, const2),            #   VMEM-resident
            pl.BlockSpec(w2.shape, const3),            #   across grid steps
            pl.BlockSpec(b2.shape, const2),
            pl.BlockSpec(w3.shape, const2),
            pl.BlockSpec(b3.shape, const2),
        ],
        out_specs=pl.BlockSpec((TB, NH), batch_map),
        compiler_params=pltpu.CompilerParams(
            dimension_semantics=("parallel",)),
        cost_estimate=pl.CostEstimate(
            flops=flops, transcendentals=0, bytes_accessed=bytes_accessed),
    )(state, action, w1s, w1a, b1, w2, b2, w3, b3)


def critic_forward_tuple(state, action, packed_params, **kw):
    """Original Critic.forward interface: 10-tuple of (B, 1) arrays."""
    q = critic_forward(state, action, packed_params, **kw)
    return tuple(q[:, i:i + 1] for i in range(NUM_HEADS))


def init_critic_params(key, state_dim, action_dim, hidden_dim):
    """Per-head params mirroring weight_init: orthogonal weights, zero bias.
    Weights stored as (in, out) (transposed vs. torch's (out, in)), stacked
    on a leading head axis."""
    D = state_dim + action_dim
    H = hidden_dim
    orth = jax.nn.initializers.orthogonal()
    keys = jax.random.split(key, 3 * NUM_HEADS)

    w1 = jnp.stack([orth(keys[3 * i + 0], (H, D), jnp.float32).T
                    for i in range(NUM_HEADS)])            # (10, D, H)
    w2 = jnp.stack([orth(keys[3 * i + 1], (H, H), jnp.float32).T
                    for i in range(NUM_HEADS)])            # (10, H, H)
    w3 = jnp.stack([orth(keys[3 * i + 2], (1, H), jnp.float32).T
                    for i in range(NUM_HEADS)])            # (10, H, 1)
    b1 = jnp.zeros((NUM_HEADS, H), jnp.float32)
    b2 = jnp.zeros((NUM_HEADS, H), jnp.float32)
    b3 = jnp.zeros((NUM_HEADS, 1), jnp.float32)
    return (w1, b1, w2, b2, w3, b3)


def pack_params(raw_params, state_dim, weight_dtype=jnp.bfloat16):
    """One-time packing of per-head params into the kernel layout.
    Layer-2 weights stay STACKED (10,H,H) -- no materialized block-diagonal."""
    w1, b1, w2, b2, w3, b3 = raw_params
    NH, D, H = w1.shape

    # Layer 1: head h occupies lane block [h*H, (h+1)*H); split state/action rows.
    w1p = jnp.transpose(w1, (1, 0, 2)).reshape(D, NH * H)   # (D, 10H)
    w1s = w1p[:state_dim].astype(weight_dtype)              # (S, 10H)
    w1a = w1p[state_dim:].astype(weight_dtype)              # (A, 10H)
    b1p = b1.reshape(1, NH * H).astype(jnp.float32)

    # Layer 2: stacked (10, H, H).
    w2s = w2.astype(weight_dtype)
    b2p = b2.reshape(1, NH * H).astype(jnp.float32)

    # Layer 3: tiny block-"diagonal" (10H, 10); column h <- head h's projection.
    w3bd = jax.scipy.linalg.block_diag(
        *[w3[h] for h in range(NH)]).astype(weight_dtype)
    b3p = b3.reshape(1, NH).astype(jnp.float32)

    return (w1s, w1a, b1p, w2s, b2p, w3bd, b3p)


def critic_reference(state, action, raw_params, weight_dtype=jnp.float32):
    """Pure-JAX per-head reference (mirrors the PyTorch forward) -> (B, 10).
    With weight_dtype=bfloat16 it quantizes weights/activations at the same
    points as the kernel, giving a tight check of packing + kernel structure."""
    w1, b1, w2, b2, w3, b3 = raw_params
    sa = jnp.concatenate([state, action], axis=1).astype(jnp.float32)

    def q(x):  # mimic the kernel's MXU operand dtype
        return x.astype(weight_dtype).astype(jnp.float32)

    outs = []
    for h in range(NUM_HEADS):
        x = jax.nn.relu(q(sa) @ q(w1[h]) + b1[h])
        x = jax.nn.relu(q(x) @ q(w2[h]) + b2[h])
        outs.append(q(x) @ q(w3[h]) + b3[h])
    return jnp.concatenate(outs, axis=1)


if __name__ == "__main__":
    # Small shapes consistent with the module (smoke test; real SAC uses
    # hidden_dim=256 and batch>=256, which this kernel handles via the grid).
    batch = 2
    state_dim = 12
    action_dim = 4
    hidden_dim = 32

    key = jax.random.PRNGKey(0)
    k_params, k_state, k_action, k_state2, k_action2 = jax.random.split(key, 5)

    raw_params = init_critic_params(k_params, state_dim, action_dim, hidden_dim)
    packed_params = pack_params(raw_params, state_dim)        # bf16 weights

    state = jax.random.normal(k_state, (batch, state_dim), jnp.float32)
    action = jax.random.normal(k_action, (batch, action_dim), jnp.float32)

    q = jax.block_until_ready(critic_forward(state, action, packed_params))
    assert q.shape == (batch, NUM_HEADS)

    # Tight check vs. a reference that applies the same bf16 quantization
    # (validates packing, per-head loop, and layer-3 block structure).
    q_ref_bf16 = critic_reference(state, action, raw_params, jnp.bfloat16)
    assert jnp.allclose(q, q_ref_bf16, atol=1e-3, rtol=1e-3)

    # Loose check vs. the pure-f32 PyTorch-equivalent reference
    # (documents bf16 quantization error bound).
    q_ref_f32 = critic_reference(state, action, raw_params, jnp.float32)
    assert jnp.allclose(q, q_ref_f32, atol=5e-2, rtol=5e-2)

    # Original 10-tuple interface still available.
    q_tuple = critic_forward_tuple(state, action, packed_params)
    assert len(q_tuple) == NUM_HEADS
    assert all(qi.shape == (batch, 1) for qi in q_tuple)
    for i in range(NUM_HEADS):
        assert jnp.allclose(q_tuple[i][:, 0], q_ref_bf16[:, i],
                            atol=1e-3, rtol=1e-3)

    # Exercise the batch grid (grid > 1, pipelined / megacore-parallel path).
    batch2 = 16
    state2 = jax.random.normal(k_state2, (batch2, state_dim), jnp.float32)
    action2 = jax.random.normal(k_action2, (batch2, action_dim), jnp.float32)
    q2 = jax.block_until_ready(
        critic_forward(state2, action2, packed_params, block_b=8))
    q2_ref = critic_reference(state2, action2, raw_params, jnp.bfloat16)
    assert q2.shape == (batch2, NUM_HEADS)
    assert jnp.allclose(q2, q2_ref, atol=1e-3, rtol=1e-3)

    print("KERNEL_OK")
</pallas_src>

<mosaic_0001>
module attributes {stable_mosaic.version = 11 : i64} {
  func.func @critic_kernel(%arg0: i32, %arg1: memref<2x12xf32, #tpu.memory_space<vmem>>, %arg2: memref<2x4xf32, #tpu.memory_space<vmem>>, %arg3: memref<12x320xbf16, #tpu.memory_space<vmem>>, %arg4: memref<4x320xbf16, #tpu.memory_space<vmem>>, %arg5: memref<1x320xf32, #tpu.memory_space<vmem>>, %arg6: memref<10x32x32xbf16, #tpu.memory_space<vmem>>, %arg7: memref<1x320xf32, #tpu.memory_space<vmem>>, %arg8: memref<320x10xbf16, #tpu.memory_space<vmem>>, %arg9: memref<1x10xf32, #tpu.memory_space<vmem>>, %arg10: memref<2x10xf32, #tpu.memory_space<vmem>>) attributes {dimension_semantics = [#tpu.dimension_semantics<parallel>], iteration_bounds = array<i64: 1>, scalar_prefetch = 0 : i64, scratch_operands = 0 : i64, tpu.core_type = #tpu.core_type<tc>, window_params = [{transform_indices = @transform_0, window_bounds = array<i64: 2, 12>}, {transform_indices = @transform_1, window_bounds = array<i64: 2, 4>}, {pipeline_mode = #tpu.pipeline_mode<synchronous>, transform_indices = @transform_2, window_bounds = array<i64: 12, 320>}, {pipeline_mode = #tpu.pipeline_mode<synchronous>, transform_indices = @transform_3, window_bounds = array<i64: 4, 320>}, {pipeline_mode = #tpu.pipeline_mode<synchronous>, transform_indices = @transform_4, window_bounds = array<i64: 1, 320>}, {pipeline_mode = #tpu.pipeline_mode<synchronous>, transform_indices = @transform_5, window_bounds = array<i64: 10, 32, 32>}, {pipeline_mode = #tpu.pipeline_mode<synchronous>, transform_indices = @transform_6, window_bounds = array<i64: 1, 320>}, {pipeline_mode = #tpu.pipeline_mode<synchronous>, transform_indices = @transform_7, window_bounds = array<i64: 320, 10>}, {pipeline_mode = #tpu.pipeline_mode<synchronous>, transform_indices = @transform_8, window_bounds = array<i64: 1, 10>}, {transform_indices = @transform_9, window_bounds = array<i64: 2, 10>}]} {
    %c0 = arith.constant 0 : index
    %c0_0 = arith.constant 0 : index
    %0 = vector.load %arg1[%c0, %c0_0] : memref<2x12xf32, #tpu.memory_space<vmem>>, vector<2x12xf32>
    %1 = arith.truncf %0 : vector<2x12xf32> to vector<2x12xbf16>
    %c0_1 = arith.constant 0 : index
    %c0_2 = arith.constant 0 : index
    %2 = vector.load %arg3[%c0_1, %c0_2] : memref<12x320xbf16, #tpu.memory_space<vmem>>, vector<12x320xbf16>
    %cst = arith.constant dense<0.000000e+00> : vector<2x320xf32>
    %3 = tpu.matmul %1, %2, %cst {dimension_numbers = #tpu.dot_dimension_numbers<[1], [0], [0], [1], [0, 0, 1, 1], [], []>} : vector<2x12xbf16>, vector<12x320xbf16>, vector<2x320xf32> -> vector<2x320xf32>
    %c0_3 = arith.constant 0 : index
    %c0_4 = arith.constant 0 : index
    %4 = vector.load %arg2[%c0_3, %c0_4] : memref<2x4xf32, #tpu.memory_space<vmem>>, vector<2x4xf32>
    %5 = arith.truncf %4 : vector<2x4xf32> to vector<2x4xbf16>
    %c0_5 = arith.constant 0 : index
    %c0_6 = arith.constant 0 : index
    %6 = vector.load %arg4[%c0_5, %c0_6] : memref<4x320xbf16, #tpu.memory_space<vmem>>, vector<4x320xbf16>
    %cst_7 = arith.constant dense<0.000000e+00> : vector<2x320xf32>
    %7 = tpu.matmul %5, %6, %cst_7 {dimension_numbers = #tpu.dot_dimension_numbers<[1], [0], [0], [1], [0, 0, 1, 1], [], []>} : vector<2x4xbf16>, vector<4x320xbf16>, vector<2x320xf32> -> vector<2x320xf32>
    %8 = arith.addf %3, %7 : vector<2x320xf32>
    %c0_8 = arith.constant 0 : index
    %c0_9 = arith.constant 0 : index
    %9 = vector.load %arg5[%c0_8, %c0_9] : memref<1x320xf32, #tpu.memory_space<vmem>>, vector<1x320xf32>
    %10 = vector.broadcast %9 : vector<1x320xf32> to vector<2x320xf32>
    %11 = arith.addf %8, %10 : vector<2x320xf32>
    %cst_10 = arith.constant 0.000000e+00 : f32
    %12 = vector.broadcast %cst_10 : f32 to vector<2x320xf32>
    %13 = arith.maximumf %11, %12 : vector<2x320xf32>
    %14 = arith.truncf %13 : vector<2x320xf32> to vector<2x320xbf16>
    %15 = vector.extract_strided_slice %14 {offsets = [0, 0], sizes = [2, 32], strides = [1, 1]} : vector<2x320xbf16> to vector<2x32xbf16>
    %c0_11 = arith.constant 0 : index
    %c0_12 = arith.constant 0 : index
    %c0_13 = arith.constant 0 : index
    %16 = vector.load %arg6[%c0_11, %c0_12, %c0_13] : memref<10x32x32xbf16, #tpu.memory_space<vmem>>, vector<1x32x32xbf16>
    %17 = vector.shape_cast %16 : vector<1x32x32xbf16> to vector<32x32xbf16>
    %cst_14 = arith.constant dense<0.000000e+00> : vector<2x32xf32>
    %18 = tpu.matmul %15, %17, %cst_14 {dimension_numbers = #tpu.dot_dimension_numbers<[1], [0], [0], [1], [0, 0, 1, 1], [], []>} : vector<2x32xbf16>, vector<32x32xbf16>, vector<2x32xf32> -> vector<2x32xf32>
    %c0_15 = arith.constant 0 : index
    %c0_16 = arith.constant 0 : index
    %19 = vector.load %arg7[%c0_15, %c0_16] : memref<1x320xf32, #tpu.memory_space<vmem>>, vector<1x32xf32>
    %20 = vector.broadcast %19 : vector<1x32xf32> to vector<2x32xf32>
    %21 = arith.addf %18, %20 : vector<2x32xf32>
    %cst_17 = arith.constant 0.000000e+00 : f32
    %22 = vector.broadcast %cst_17 : f32 to vector<2x32xf32>
    %23 = arith.maximumf %21, %22 : vector<2x32xf32>
    %24 = arith.truncf %23 : vector<2x32xf32> to vector<2x32xbf16>
    %25 = vector.extract_strided_slice %14 {offsets = [0, 32], sizes = [2, 32], strides = [1, 1]} : vector<2x320xbf16> to vector<2x32xbf16>
    %c1 = arith.constant 1 : index
    %c0_18 = arith.constant 0 : index
    %c0_19 = arith.constant 0 : index
    %26 = vector.load %arg6[%c1, %c0_18, %c0_19] : memref<10x32x32xbf16, #tpu.memory_space<vmem>>, vector<1x32x32xbf16>
    %27 = vector.shape_cast %26 : vector<1x32x32xbf16> to vector<32x32xbf16>
    %cst_20 = arith.constant dense<0.000000e+00> : vector<2x32xf32>
    %28 = tpu.matmul %25, %27, %cst_20 {dimension_numbers = #tpu.dot_dimension_numbers<[1], [0], [0], [1], [0, 0, 1, 1], [], []>} : vector<2x32xbf16>, vector<32x32xbf16>, vector<2x32xf32> -> vector<2x32xf32>
    %c0_21 = arith.constant 0 : index
    %c32 = arith.constant 32 : index
    %29 = vector.load %arg7[%c0_21, %c32] : memref<1x320xf32, #tpu.memory_space<vmem>>, vector<1x32xf32>
    %30 = vector.broadcast %29 : vector<1x32xf32> to vector<2x32xf32>
    %31 = arith.addf %28, %30 : vector<2x32xf32>
    %cst_22 = arith.constant 0.000000e+00 : f32
    %32 = vector.broadcast %cst_22 : f32 to vector<2x32xf32>
    %33 = arith.maximumf %31, %32 : vector<2x32xf32>
    %34 = arith.truncf %33 : vector<2x32xf32> to vector<2x32xbf16>
    %35 = vector.extract_strided_slice %14 {offsets = [0, 64], sizes = [2, 32], strides = [1, 1]} : vector<2x320xbf16> to vector<2x32xbf16>
    %c2 = arith.constant 2 : index
    %c0_23 = arith.constant 0 : index
    %c0_24 = arith.constant 0 : index
    %36 = vector.load %arg6[%c2, %c0_23, %c0_24] : memref<10x32x32xbf16, #tpu.memory_space<vmem>>, vector<1x32x32xbf16>
    %37 = vector.shape_cast %36 : vector<1x32x32xbf16> to vector<32x32xbf16>
    %cst_25 = arith.constant dense<0.000000e+00> : vector<2x32xf32>
    %38 = tpu.matmul %35, %37, %cst_25 {dimension_numbers = #tpu.dot_dimension_numbers<[1], [0], [0], [1], [0, 0, 1, 1], [], []>} : vector<2x32xbf16>, vector<32x32xbf16>, vector<2x32xf32> -> vector<2x32xf32>
    %c0_26 = arith.constant 0 : index
    %c64 = arith.constant 64 : index
    %39 = vector.load %arg7[%c0_26, %c64] : memref<1x320xf32, #tpu.memory_space<vmem>>, vector<1x32xf32>
    %40 = vector.broadcast %39 : vector<1x32xf32> to vector<2x32xf32>
    %41 = arith.addf %38, %40 : vector<2x32xf32>
    %cst_27 = arith.constant 0.000000e+00 : f32
    %42 = vector.broadcast %cst_27 : f32 to vector<2x32xf32>
    %43 = arith.maximumf %41, %42 : vector<2x32xf32>
    %44 = arith.truncf %43 : vector<2x32xf32> to vector<2x32xbf16>
    %45 = vector.extract_strided_slice %14 {offsets = [0, 96], sizes = [2, 32], strides = [1, 1]} : vector<2x320xbf16> to vector<2x32xbf16>
    %c3 = arith.constant 3 : index
    %c0_28 = arith.constant 0 : index
    %c0_29 = arith.constant 0 : index
    %46 = vector.load %arg6[%c3, %c0_28, %c0_29] : memref<10x32x32xbf16, #tpu.memory_space<vmem>>, vector<1x32x32xbf16>
    %47 = vector.shape_cast %46 : vector<1x32x32xbf16> to vector<32x32xbf16>
    %cst_30 = arith.constant dense<0.000000e+00> : vector<2x32xf32>
    %48 = tpu.matmul %45, %47, %cst_30 {dimension_numbers = #tpu.dot_dimension_numbers<[1], [0], [0], [1], [0, 0, 1, 1], [], []>} : vector<2x32xbf16>, vector<32x32xbf16>, vector<2x32xf32> -> vector<2x32xf32>
    %c0_31 = arith.constant 0 : index
    %c96 = arith.constant 96 : index
    %49 = vector.load %arg7[%c0_31, %c96] : memref<1x320xf32, #tpu.memory_space<vmem>>, vector<1x32xf32>
    %50 = vector.broadcast %49 : vector<1x32xf32> to vector<2x32xf32>
    %51 = arith.addf %48, %50 : vector<2x32xf32>
    %cst_32 = arith.constant 0.000000e+00 : f32
    %52 = vector.broadcast %cst_32 : f32 to vector<2x32xf32>
    %53 = arith.maximumf %51, %52 : vector<2x32xf32>
    %54 = arith.truncf %53 : vector<2x32xf32> to vector<2x32xbf16>
    %55 = vector.extract_strided_slice %14 {offsets = [0, 128], sizes = [2, 32], strides = [1, 1]} : vector<2x320xbf16> to vector<2x32xbf16>
    %c4 = arith.constant 4 : index
    %c0_33 = arith.constant 0 : index
    %c0_34 = arith.constant 0 : index
    %56 = vector.load %arg6[%c4, %c0_33, %c0_34] : memref<10x32x32xbf16, #tpu.memory_space<vmem>>, vector<1x32x32xbf16>
    %57 = vector.shape_cast %56 : vector<1x32x32xbf16> to vector<32x32xbf16>
    %cst_35 = arith.constant dense<0.000000e+00> : vector<2x32xf32>
    %58 = tpu.matmul %55, %57, %cst_35 {dimension_numbers = #tpu.dot_dimension_numbers<[1], [0], [0], [1], [0, 0, 1, 1], [], []>} : vector<2x32xbf16>, vector<32x32xbf16>, vector<2x32xf32> -> vector<2x32xf32>
    %c0_36 = arith.constant 0 : index
    %c128 = arith.constant 128 : index
    %59 = vector.load %arg7[%c0_36, %c128] : memref<1x320xf32, #tpu.memory_space<vmem>>, vector<1x32xf32>
    %60 = vector.broadcast %59 : vector<1x32xf32> to vector<2x32xf32>
    %61 = arith.addf %58, %60 : vector<2x32xf32>
    %cst_37 = arith.constant 0.000000e+00 : f32
    %62 = vector.broadcast %cst_37 : f32 to vector<2x32xf32>
    %63 = arith.maximumf %61, %62 : vector<2x32xf32>
    %64 = arith.truncf %63 : vector<2x32xf32> to vector<2x32xbf16>
    %65 = vector.extract_strided_slice %14 {offsets = [0, 160], sizes = [2, 32], strides = [1, 1]} : vector<2x320xbf16> to vector<2x32xbf16>
    %c5 = arith.constant 5 : index
    %c0_38 = arith.constant 0 : index
    %c0_39 = arith.constant 0 : index
    %66 = vector.load %arg6[%c5, %c0_38, %c0_39] : memref<10x32x32xbf16, #tpu.memory_space<vmem>>, vector<1x32x32xbf16>
    %67 = vector.shape_cast %66 : vector<1x32x32xbf16> to vector<32x32xbf16>
    %cst_40 = arith.constant dense<0.000000e+00> : vector<2x32xf32>
    %68 = tpu.matmul %65, %67, %cst_40 {dimension_numbers = #tpu.dot_dimension_numbers<[1], [0], [0], [1], [0, 0, 1, 1], [], []>} : vector<2x32xbf16>, vector<32x32xbf16>, vector<2x32xf32> -> vector<2x32xf32>
    %c0_41 = arith.constant 0 : index
    %c160 = arith.constant 160 : index
    %69 = vector.load %arg7[%c0_41, %c160] : memref<1x320xf32, #tpu.memory_space<vmem>>, vector<1x32xf32>
    %70 = vector.broadcast %69 : vector<1x32xf32> to vector<2x32xf32>
    %71 = arith.addf %68, %70 : vector<2x32xf32>
    %cst_42 = arith.constant 0.000000e+00 : f32
    %72 = vector.broadcast %cst_42 : f32 to vector<2x32xf32>
    %73 = arith.maximumf %71, %72 : vector<2x32xf32>
    %74 = arith.truncf %73 : vector<2x32xf32> to vector<2x32xbf16>
    %75 = vector.extract_strided_slice %14 {offsets = [0, 192], sizes = [2, 32], strides = [1, 1]} : vector<2x320xbf16> to vector<2x32xbf16>
    %c6 = arith.constant 6 : index
    %c0_43 = arith.constant 0 : index
    %c0_44 = arith.constant 0 : index
    %76 = vector.load %arg6[%c6, %c0_43, %c0_44] : memref<10x32x32xbf16, #tpu.memory_space<vmem>>, vector<1x32x32xbf16>
    %77 = vector.shape_cast %76 : vector<1x32x32xbf16> to vector<32x32xbf16>
    %cst_45 = arith.constant dense<0.000000e+00> : vector<2x32xf32>
    %78 = tpu.matmul %75, %77, %cst_45 {dimension_numbers = #tpu.dot_dimension_numbers<[1], [0], [0], [1], [0, 0, 1, 1], [], []>} : vector<2x32xbf16>, vector<32x32xbf16>, vector<2x32xf32> -> vector<2x32xf32>
    %c0_46 = arith.constant 0 : index
    %c192 = arith.constant 192 : index
    %79 = vector.load %arg7[%c0_46, %c192] : memref<1x320xf32, #tpu.memory_space<vmem>>, vector<1x32xf32>
    %80 = vector.broadcast %79 : vector<1x32xf32> to vector<2x32xf32>
    %81 = arith.addf %78, %80 : vector<2x32xf32>
    %cst_47 = arith.constant 0.000000e+00 : f32
    %82 = vector.broadcast %cst_47 : f32 to vector<2x32xf32>
    %83 = arith.maximumf %81, %82 : vector<2x32xf32>
    %84 = arith.truncf %83 : vector<2x32xf32> to vector<2x32xbf16>
    %85 = vector.extract_strided_slice %14 {offsets = [0, 224], sizes = [2, 32], strides = [1, 1]} : vector<2x320xbf16> to vector<2x32xbf16>
    %c7 = arith.constant 7 : index
    %c0_48 = arith.constant 0 : index
    %c0_49 = arith.constant 0 : index
    %86 = vector.load %arg6[%c7, %c0_48, %c0_49] : memref<10x32x32xbf16, #tpu.memory_space<vmem>>, vector<1x32x32xbf16>
    %87 = vector.shape_cast %86 : vector<1x32x32xbf16> to vector<32x32xbf16>
    %cst_50 = arith.constant dense<0.000000e+00> : vector<2x32xf32>
    %88 = tpu.matmul %85, %87, %cst_50 {dimension_numbers = #tpu.dot_dimension_numbers<[1], [0], [0], [1], [0, 0, 1, 1], [], []>} : vector<2x32xbf16>, vector<32x32xbf16>, vector<2x32xf32> -> vector<2x32xf32>
    %c0_51 = arith.constant 0 : index
    %c224 = arith.constant 224 : index
    %89 = vector.load %arg7[%c0_51, %c224] : memref<1x320xf32, #tpu.memory_space<vmem>>, vector<1x32xf32>
    %90 = vector.broadcast %89 : vector<1x32xf32> to vector<2x32xf32>
    %91 = arith.addf %88, %90 : vector<2x32xf32>
    %cst_52 = arith.constant 0.000000e+00 : f32
    %92 = vector.broadcast %cst_52 : f32 to vector<2x32xf32>
    %93 = arith.maximumf %91, %92 : vector<2x32xf32>
    %94 = arith.truncf %93 : vector<2x32xf32> to vector<2x32xbf16>
    %95 = vector.extract_strided_slice %14 {offsets = [0, 256], sizes = [2, 32], strides = [1, 1]} : vector<2x320xbf16> to vector<2x32xbf16>
    %c8 = arith.constant 8 : index
    %c0_53 = arith.constant 0 : index
    %c0_54 = arith.constant 0 : index
    %96 = vector.load %arg6[%c8, %c0_53, %c0_54] : memref<10x32x32xbf16, #tpu.memory_space<vmem>>, vector<1x32x32xbf16>
    %97 = vector.shape_cast %96 : vector<1x32x32xbf16> to vector<32x32xbf16>
    %cst_55 = arith.constant dense<0.000000e+00> : vector<2x32xf32>
    %98 = tpu.matmul %95, %97, %cst_55 {dimension_numbers = #tpu.dot_dimension_numbers<[1], [0], [0], [1], [0, 0, 1, 1], [], []>} : vector<2x32xbf16>, vector<32x32xbf16>, vector<2x32xf32> -> vector<2x32xf32>
    %c0_56 = arith.constant 0 : index
    %c256 = arith.constant 256 : index
    %99 = vector.load %arg7[%c0_56, %c256] : memref<1x320xf32, #tpu.memory_space<vmem>>, vector<1x32xf32>
    %100 = vector.broadcast %99 : vector<1x32xf32> to vector<2x32xf32>
    %101 = arith.addf %98, %100 : vector<2x32xf32>
    %cst_57 = arith.constant 0.000000e+00 : f32
    %102 = vector.broadcast %cst_57 : f32 to vector<2x32xf32>
    %103 = arith.maximumf %101, %102 : vector<2x32xf32>
    %104 = arith.truncf %103 : vector<2x32xf32> to vector<2x32xbf16>
    %105 = vector.extract_strided_slice %14 {offsets = [0, 288], sizes = [2, 32], strides = [1, 1]} : vector<2x320xbf16> to vector<2x32xbf16>
    %c9 = arith.constant 9 : index
    %c0_58 = arith.constant 0 : index
    %c0_59 = arith.constant 0 : index
    %106 = vector.load %arg6[%c9, %c0_58, %c0_59] : memref<10x32x32xbf16, #tpu.memory_space<vmem>>, vector<1x32x32xbf16>
    %107 = vector.shape_cast %106 : vector<1x32x32xbf16> to vector<32x32xbf16>
    %cst_60 = arith.constant dense<0.000000e+00> : vector<2x32xf32>
    %108 = tpu.matmul %105, %107, %cst_60 {dimension_numbers = #tpu.dot_dimension_numbers<[1], [0], [0], [1], [0, 0, 1, 1], [], []>} : vector<2x32xbf16>, vector<32x32xbf16>, vector<2x32xf32> -> vector<2x32xf32>
    %c0_61 = arith.constant 0 : index
    %c288 = arith.constant 288 : index
    %109 = vector.load %arg7[%c0_61, %c288] : memref<1x320xf32, #tpu.memory_space<vmem>>, vector<1x32xf32>
    %110 = vector.broadcast %109 : vector<1x32xf32> to vector<2x32xf32>
    %111 = arith.addf %108, %110 : vector<2x32xf32>
    %cst_62 = arith.constant 0.000000e+00 : f32
    %112 = vector.broadcast %cst_62 : f32 to vector<2x32xf32>
    %113 = arith.maximumf %111, %112 : vector<2x32xf32>
    %114 = arith.truncf %113 : vector<2x32xf32> to vector<2x32xbf16>
    %115 = tpu.concatenate %24, %34, %44, %54, %64, %74, %84, %94, %104, %114 in 1 : vector<2x32xbf16>, vector<2x32xbf16>, vector<2x32xbf16>, vector<2x32xbf16>, vector<2x32xbf16>, vector<2x32xbf16>, vector<2x32xbf16>, vector<2x32xbf16>, vector<2x32xbf16>, vector<2x32xbf16> -> vector<2x320xbf16>
    %c0_63 = arith.constant 0 : index
    %c0_64 = arith.constant 0 : index
    %116 = vector.load %arg8[%c0_63, %c0_64] : memref<320x10xbf16, #tpu.memory_space<vmem>>, vector<320x10xbf16>
    %cst_65 = arith.constant dense<0.000000e+00> : vector<2x10xf32>
    %117 = tpu.matmul %115, %116, %cst_65 {dimension_numbers = #tpu.dot_dimension_numbers<[1], [0], [0], [1], [0, 0, 1, 1], [], []>} : vector<2x320xbf16>, vector<320x10xbf16>, vector<2x10xf32> -> vector<2x10xf32>
    %c0_66 = arith.constant 0 : index
    %c0_67 = arith.constant 0 : index
    %118 = vector.load %arg9[%c0_66, %c0_67] : memref<1x10xf32, #tpu.memory_space<vmem>>, vector<1x10xf32>
    %119 = vector.broadcast %118 : vector<1x10xf32> to vector<2x10xf32>
    %120 = arith.addf %117, %119 : vector<2x10xf32>
    %c0_68 = arith.constant 0 : index
    %c0_69 = arith.constant 0 : index
    %121 = vector.load %arg10[%c0_68, %c0_69] : memref<2x10xf32, #tpu.memory_space<vmem>>, vector<2x10xf32>
    tpu.vector_store %arg10[%c0_68, %c0_69], %120 {strides = array<i32>} : memref<2x10xf32, #tpu.memory_space<vmem>>, vector<2x10xf32>,
    return
  }
  func.func @transform_0(%arg0: i32) -> (i32, i32) {
    %c0_i32 = arith.constant 0 : i32
    %c0_i32_0 = arith.constant 0 : i32
    return %arg0, %c0_i32 : i32, i32
  }
  func.func @transform_1(%arg0: i32) -> (i32, i32) {
    %c0_i32 = arith.constant 0 : i32
    %c0_i32_0 = arith.constant 0 : i32
    return %arg0, %c0_i32 : i32, i32
  }
  func.func @transform_2(%arg0: i32) -> (i32, i32) {
    %c0_i32 = arith.constant 0 : i32
    %c0_i32_0 = arith.constant 0 : i32
    %c0_i32_1 = arith.constant 0 : i32
    return %c0_i32, %c0_i32_0 : i32, i32
  }
  func.func @transform_3(%arg0: i32) -> (i32, i32) {
    %c0_i32 = arith.constant 0 : i32
    %c0_i32_0 = arith.constant 0 : i32
    %c0_i32_1 = arith.constant 0 : i32
    return %c0_i32, %c0_i32_0 : i32, i32
  }
  func.func @transform_4(%arg0: i32) -> (i32, i32) {
    %c0_i32 = arith.constant 0 : i32
    %c0_i32_0 = arith.constant 0 : i32
    %c0_i32_1 = arith.constant 0 : i32
    return %c0_i32, %c0_i32_0 : i32, i32
  }
  func.func @transform_5(%arg0: i32) -> (i32, i32, i32) {
    %c0_i32 = arith.constant 0 : i32
    %c0_i32_0 = arith.constant 0 : i32
    %c0_i32_1 = arith.constant 0 : i32
    %c0_i32_2 = arith.constant 0 : i32
    return %c0_i32, %c0_i32_0, %c0_i32_1 : i32, i32, i32
  }
  func.func @transform_6(%arg0: i32) -> (i32, i32) {
    %c0_i32 = arith.constant 0 : i32
    %c0_i32_0 = arith.constant 0 : i32
    %c0_i32_1 = arith.constant 0 : i32
    return %c0_i32, %c0_i32_0 : i32, i32
  }
  func.func @transform_7(%arg0: i32) -> (i32, i32) {
    %c0_i32 = arith.constant 0 : i32
    %c0_i32_0 = arith.constant 0 : i32
    %c0_i32_1 = arith.constant 0 : i32
    return %c0_i32, %c0_i32_0 : i32, i32
  }
  func.func @transform_8(%arg0: i32) -> (i32, i32) {
    %c0_i32 = arith.constant 0 : i32
    %c0_i32_0 = arith.constant 0 : i32
    %c0_i32_1 = arith.constant 0 : i32
    return %c0_i32, %c0_i32_0 : i32, i32
  }
  func.func @transform_9(%arg0: i32) -> (i32, i32) {
    %c0_i32 = arith.constant 0 : i32
    %c0_i32_0 = arith.constant 0 : i32
    return %arg0, %c0_i32 : i32, i32
  }
}

</mosaic_0001>

<llo_original>
// kernel: tpu_custom_call.1
$region0: #{tpu_custom_call.1}
  #allocation0 [shape = 'u32[]', space=smem, size = 0x4, offset = 0x4, fixed_abs, tag = 'smem constant byte address 0x4 - core index']
  #allocation1 [shape = 'u32[144,128]{1,0:T(1,128)}', space=vmem, size = 0x12000, scoped, tag = 'internal scratch']
  %s0 = inlined_call_operand.hbm [shape: f32[2,12], index: 0, kind: input, shape index: {}]
  %s1 = inlined_call_operand.hbm [shape: f32[2,4], index: 1, kind: input, shape index: {}]
  %s2 = inlined_call_operand.vmem [shape: bf16[12,320], index: 2, kind: input, shape index: {}]
  %s3 = inlined_call_operand.vmem [shape: bf16[4,320], index: 3, kind: input, shape index: {}]
  %s4 = inlined_call_operand.vmem [shape: f32[1,320], index: 4, kind: input, shape index: {}]
  %s5 = inlined_call_operand.vmem [shape: bf16[10,32,32], index: 5, kind: input, shape index: {}]
  %s6 = inlined_call_operand.hbm [shape: f32[1,320], index: 6, kind: input, shape index: {}]
  %s7 = inlined_call_operand.vmem [shape: bf16[320,10], index: 7, kind: input, shape index: {}]
  %s8 = inlined_call_operand.vmem [shape: f32[1,10], index: 8, kind: input, shape index: {}]
  %s9 = inlined_call_operand.hbm [shape: f32[2,10], index: 9, kind: output, shape index: {}]
  %s10 = sld [smem:[#allocation0]]
  $region58: #{tpu_custom_call.1} parent=0
    _
  %s12 = ssub.s32 1, %s10
  %s13 = scalar_select 0, %s12, %s10
  $region1: #{tpu_custom_call.1} parent=0
    #allocation2 [shape = 'u8[1024]{0}', space=vmem, size = 0x400, scoped, tag = 'input window, operand 0, single buffered']
    #allocation3 [shape = 's32[1]{0}', space=sflag, size = 0x4, scoped, tag = 'scoped memory for tpu_custom_call.1']
    #allocation4 [shape = 's32[1]{0}', space=sflag, size = 0x4, scoped, tag = 'scoped memory for tpu_custom_call.1']
    #allocation5 [shape = 'u8[1024]{0}', space=vmem, size = 0x400, scoped, tag = 'input window, operand 1, single buffered']
    #allocation6 [shape = 's32[1]{0}', space=sflag, size = 0x4, scoped, tag = 'scoped memory for tpu_custom_call.1']
    #allocation7 [shape = 'u8[1536]{0}', space=vmem, size = 0x800, scoped, tag = 'input window, operand 6, single buffered']
    #allocation8 [shape = 'u8[1024]{0}', space=vmem, size = 0x400, scoped, tag = 'output window, operand 0, single buffered']
    %14 = vsyncpa [#allocation3], 0
    %15 = vsyncpa [#allocation6], 0
    %16 = vsyncpa [#allocation4], 0
    // Predicated region
    $region2: #{tpu_custom_call.1} parent=1 // pred_check
      _
    $region3: #{tpu_custom_call.1} parent=1 // pred_check_branch
      %18 = sbr.rel (0) target = $region5
    $region4: #{tpu_custom_call.1} parent=1 // pred_region
      %s20 = ssub.s32 32, 32
      %21 = vsyncadd [#allocation3], %s20
      %s23 = sshll.u32 [#allocation2], 4
      %s24 = int_to_ptr.vmem [resolvable:$true] %s23
      %26 = dma.hbm_to_vmem [thread:$0]  %s0, 32, %s24, [#allocation3]
    $region5: #{tpu_custom_call.1} parent=1 // pred_fallthru
      _
    // Predicated region
    $region6: #{tpu_custom_call.1} parent=1 // pred_check
      _
    $region7: #{tpu_custom_call.1} parent=1 // pred_check_branch
      %28 = sbr.rel (0) target = $region9
    $region8: #{tpu_custom_call.1} parent=1 // pred_region
      %s30 = ssub.s32 32, 32
      %31 = vsyncadd [#allocation6], %s30
      %s33 = sshll.u32 [#allocation5], 4
      %s34 = int_to_ptr.vmem [resolvable:$true] %s33
      %36 = dma.hbm_to_vmem [thread:$0]  %s1, 32, %s34, [#allocation6]
    $region9: #{tpu_custom_call.1} parent=1 // pred_fallthru
      _
    // Predicated region
    $region10: #{tpu_custom_call.1} parent=1 // pred_check
      _
    $region11: #{tpu_custom_call.1} parent=1 // pred_check_branch
      %38 = sbr.rel (0) target = $region13
    $region12: #{tpu_custom_call.1} parent=1 // pred_region
      _
    $region13: #{tpu_custom_call.1} parent=1 // pred_fallthru
      _
    // Predicated region
    $region14: #{tpu_custom_call.1} parent=1 // pred_check
      _
    $region15: #{tpu_custom_call.1} parent=1 // pred_check_branch
      %40 = sbr.rel (0) target = $region17
    $region16: #{tpu_custom_call.1} parent=1 // pred_region
      _
    $region17: #{tpu_custom_call.1} parent=1 // pred_fallthru
      _
    // Predicated region
    $region18: #{tpu_custom_call.1} parent=1 // pred_check
      _
    $region19: #{tpu_custom_call.1} parent=1 // pred_check_branch
      %42 = sbr.rel (0) target = $region21
    $region20: #{tpu_custom_call.1} parent=1 // pred_region
      _
    $region21: #{tpu_custom_call.1} parent=1 // pred_fallthru
      _
    // Predicated region
    $region22: #{tpu_custom_call.1} parent=1 // pred_check
      _
    $region23: #{tpu_custom_call.1} parent=1 // pred_check_branch
      %44 = sbr.rel (0) target = $region25
    $region24: #{tpu_custom_call.1} parent=1 // pred_region
      _
    $region25: #{tpu_custom_call.1} parent=1 // pred_fallthru
      _
    // Predicated region
    $region26: #{tpu_custom_call.1} parent=1 // pred_check
      _
    $region27: #{tpu_custom_call.1} parent=1 // pred_check_branch
      %46 = sbr.rel (0) target = $region29
    $region28: #{tpu_custom_call.1} parent=1 // pred_region
      %s48 = ssub.s32 48, 48
      %49 = vsyncadd [#allocation6], %s48
      %s51 = sshll.u32 [#allocation7], 4
      %s52 = int_to_ptr.vmem [resolvable:$true] %s51
      %54 = dma.hbm_to_vmem [thread:$0]  %s6, 48, %s52, [#allocation6]
    $region29: #{tpu_custom_call.1} parent=1 // pred_fallthru
      _
    // Predicated region
    $region30: #{tpu_custom_call.1} parent=1 // pred_check
      _
    $region31: #{tpu_custom_call.1} parent=1 // pred_check_branch
      %56 = sbr.rel (0) target = $region33
    $region32: #{tpu_custom_call.1} parent=1 // pred_region
      _
    $region33: #{tpu_custom_call.1} parent=1 // pred_fallthru
      _
    // Predicated region
    $region34: #{tpu_custom_call.1} parent=1 // pred_check
      _
    $region35: #{tpu_custom_call.1} parent=1 // pred_check_branch
      %58 = sbr.rel (0) target = $region37
    $region36: #{tpu_custom_call.1} parent=1 // pred_region
      _
    $region37: #{tpu_custom_call.1} parent=1 // pred_fallthru
      _
    // Predicated region
    $region38: #{tpu_custom_call.1} parent=1 // pred_check
      _
    $region39: #{tpu_custom_call.1} parent=1 // pred_check_branch
      %60 = sbr.rel (0) target = $region41
    $region40: #{tpu_custom_call.1} parent=1 // pred_region
      %61 = dma.done [#allocation3], 32
    $region41: #{tpu_custom_call.1} parent=1 // pred_fallthru
      _
    // Predicated region
    $region42: #{tpu_custom_call.1} parent=1 // pred_check
      _
    $region43: #{tpu_custom_call.1} parent=1 // pred_check_branch
      %63 = sbr.rel (0) target = $region45
    $region44: #{tpu_custom_call.1} parent=1 // pred_region
      %64 = dma.done [#allocation6], 32
    $region45: #{tpu_custom_call.1} parent=1 // pred_fallthru
      _
    // Predicated region
    $region46: #{tpu_custom_call.1} parent=1 // pred_check
      _
    $region47: #{tpu_custom_call.1} parent=1 // pred_check_branch
      %66 = sbr.rel (0) target = $region49
    $region48: #{tpu_custom_call.1} parent=1 // pred_region
      %67 = dma.done [#allocation6], 48
    $region49: #{tpu_custom_call.1} parent=1 // pred_fallthru
      _
    %v69 = vld [vmem:[#allocation2] sm:$0x3]
    %v70 = vpack.c.bf16 %v69, %v69
    %v71 = vld [vmem:[%s2] sm:$0xff]
    %v72 = vld [vmem:[%s2 + $0x8] sm:$0xf]
    %v73 = vld [vmem:[%s2 + $0xc] sm:$0x33]
    %v74 = vld [vmem:[%s2 + $0x14] sm:$0x3]
    %v75 = vld [vmem:[#allocation5] sm:$0x3]
    %v76 = vpack.c.bf16 %v75, %v75
    %v77 = vld [vmem:[%s3] sm:$0x3f]
    %v79 = vcombine.high %v77, %v77
    %v81 = vunpack.c.l.s4 1983009808
    %v82 = vunpack.c.0.s8 %v81
    %v83 = vlaneseq
    %v84 = vshrl.u32 %v83, 7
    %v85 = vsub.s32 %v82, %v84
    %v86 = vrot.slane %v77, %v85
    %v88 = vunpack.c.l.s4 1983009808
    %v89 = vunpack.c.0.s8 %v88
    %v90 = vlaneseq
    %v91 = vshrl.u32 %v90, 7
    %v92 = vsub.s32 %v89, %v91
    %v93 = vrot.slane %v79, %v92
    %v94 = vcombine.high %v86, %v86
    %vm95 = vcmask 31744
    %v97 = vsel %vm95, %v76, 0
    %vm99 = vcmask 1041408
    %v101 = vsel %vm99, %v86, 0
    %v104 = vsel %vm99, %v94, 0
    %v107 = vsel %vm99, %v93, 0
    %109 = vmatprep.subr.bf16.mxu0 0
    %110 = vmatpush1.bf16.msra.mxu0 0
    %111 = vmatprep.subr.bf16.mxu0 0
    %112 = vmatpush1.bf16.msra.mxu0 0
    %113 = vmatprep.subr.bf16.mxu0 0
    %114 = vmatpush1.bf16.msra.mxu0 0
    %115 = vmatprep.subr.bf16.mxu0 0
    %116 = vmatpush1.bf16.msra.mxu0 0
    %117 = vmatprep.subr.bf16.mxu0 0
    %118 = vmatpush1.bf16.msra.mxu0 0
    %119 = vmatprep.subr.bf16.mxu0 0
    %120 = vmatpush1.bf16.msra.mxu0 0
    %121 = vmatprep.subr.bf16.mxu0 0
    %122 = vmatpush1.bf16.msra.mxu0 0
    %123 = vmatprep.subr.bf16.mxu0 %v104
    %124 = vmatpush1.bf16.msra.mxu0 %v101
    %125 = vmatprep.subr.bf16.mxu0 0
    %126 = vmatpush2.bf16.msra.mxu0 0
    %127 = vmatprep.subr.bf16.mxu0 0
    %128 = vmatpush2.bf16.msra.mxu0 0
    %129 = vmatprep.subr.bf16.mxu0 0
    %130 = vmatpush2.bf16.msra.mxu0 0
    %131 = vmatprep.subr.bf16.mxu0 0
    %132 = vmatpush2.bf16.msra.mxu0 0
    %133 = vmatprep.subr.bf16.mxu0 0
    %134 = vmatpush2.bf16.msra.mxu0 0
    %135 = vmatprep.subr.bf16.mxu0 0
    %136 = vmatpush2.bf16.msra.mxu0 0
    %137 = vmatprep.subr.bf16.mxu0 0
    %138 = vmatpush2.bf16.msra.mxu0 0
    %139 = vmatprep.subr.bf16.mxu0 0
    %140 = vmatpush2.bf16.msra.mxu0 0
    %141 = vmatprep.mubr.bf16.mxu0 0
    %142 = vmatmul.mubr.bf16.gmra.mxu0 %v97
    %v143 = vpop.f32.mrf.mxu0
    %v144 = vadd.f32 0.0, %v143
    %v145 = vpop.f32.mrf.mxu0
    %v146 = vadd.f32 0.0, %v145
    %v147 = vpop.f32.mrf.mxu0
    %v148 = vpop.f32.mrf.mxu0
    %149 = vdwg.mxu0
    %150 = vmatprep.subr.bf16.mxu0 0
    %151 = vmatpush1.bf16.msra.mxu0 0
    %152 = vmatprep.subr.bf16.mxu0 0
    %153 = vmatpush1.bf16.msra.mxu0 0
    %154 = vmatprep.subr.bf16.mxu0 0
    %155 = vmatpush1.bf16.msra.mxu0 0
    %156 = vmatprep.subr.bf16.mxu0 0
    %157 = vmatpush1.bf16.msra.mxu0 0
    %158 = vmatprep.subr.bf16.mxu0 0
    %159 = vmatpush1.bf16.msra.mxu0 0
    %160 = vmatprep.subr.bf16.mxu0 0
    %161 = vmatpush1.bf16.msra.mxu0 0
    %162 = vmatprep.subr.bf16.mxu0 0
    %163 = vmatpush1.bf16.msra.mxu0 0
    %164 = vmatprep.subr.bf16.mxu0 0
    %165 = vmatpush1.bf16.msra.mxu0 %v107
    %166 = vmatprep.subr.bf16.mxu0 0
    %167 = vmatpush2.bf16.msra.mxu0 0
    %168 = vmatprep.subr.bf16.mxu0 0
    %169 = vmatpush2.bf16.msra.mxu0 0
    %170 = vmatprep.subr.bf16.mxu0 0
    %171 = vmatpush2.bf16.msra.mxu0 0
    %172 = vmatprep.subr.bf16.mxu0 0
    %173 = vmatpush2.bf16.msra.mxu0 0
    %174 = vmatprep.subr.bf16.mxu0 0
    %175 = vmatpush2.bf16.msra.mxu0 0
    %176 = vmatprep.subr.bf16.mxu0 0
    %177 = vmatpush2.bf16.msra.mxu0 0
    %178 = vmatprep.subr.bf16.mxu0 0
    %179 = vmatpush2.bf16.msra.mxu0 0
    %180 = vmatprep.subr.bf16.mxu0 0
    %181 = vmatpush2.bf16.msra.mxu0 0
    %182 = vmatprep.mubr.bf16.mxu0 0
    %183 = vmatmul.mubr.bf16.gmra.mxu0 %v97
    %v184 = vpop.f32.mrf.mxu0
    %v185 = vadd.f32 0.0, %v184
    %v186 = vpop.f32.mrf.mxu0
    %v187 = vpop.f32.mrf.mxu0
    %v188 = vpop.f32.mrf.mxu0
    %189 = vdwg.mxu0
    %v194 = vunpack.c.l.b16 %v71
    %v195 = vunpack.c.h.b16 %v71
    %v196 = vunpack.c.l.b16 %v72
    %v197 = vunpack.c.l.b16 %v73
    %v198 = vunpack.c.h.b16 %v73
    %v199 = vunpack.c.l.b16 %v74
    %v200 = vpack.c.b16 %v197, %v194
    %v201 = vpack.c.b16 %v198, %v195
    %v202 = vpack.c.b16 %v199, %v196
    %vm203 = vcmask 97280
    %v205 = vsel %vm203, %v70, 0
    %vm207 = vcmask 1045504
    %v209 = vsel %vm207, %v200, 0
    %v212 = vsel %vm207, %v201, 0
    %v215 = vsel %vm207, %v202, 0
    %217 = vmatprep.subr.bf16.mxu0 0
    %218 = vmatpush1.bf16.msra.mxu0 0
    %219 = vmatprep.subr.bf16.mxu0 0
    %220 = vmatpush1.bf16.msra.mxu0 0
    %221 = vmatprep.subr.bf16.mxu0 0
    %222 = vmatpush1.bf16.msra.mxu0 0
    %223 = vmatprep.subr.bf16.mxu0 0
    %224 = vmatpush1.bf16.msra.mxu0 0
    %225 = vmatprep.subr.bf16.mxu0 0
    %226 = vmatpush1.bf16.msra.mxu0 0
    %227 = vmatprep.subr.bf16.mxu0 0
    %228 = vmatpush1.bf16.msra.mxu0 0
    %229 = vmatprep.subr.bf16.mxu0 0
    %230 = vmatpush1.bf16.msra.mxu0 0
    %231 = vmatprep.subr.bf16.mxu0 %v212
    %232 = vmatpush1.bf16.msra.mxu0 %v209
    %233 = vmatprep.subr.bf16.mxu0 0
    %234 = vmatpush2.bf16.msra.mxu0 0
    %235 = vmatprep.subr.bf16.mxu0 0
    %236 = vmatpush2.bf16.msra.mxu0 0
    %237 = vmatprep.subr.bf16.mxu0 0
    %238 = vmatpush2.bf16.msra.mxu0 0
    %239 = vmatprep.subr.bf16.mxu0 0
    %240 = vmatpush2.bf16.msra.mxu0 0
    %241 = vmatprep.subr.bf16.mxu0 0
    %242 = vmatpush2.bf16.msra.mxu0 0
    %243 = vmatprep.subr.bf16.mxu0 0
    %244 = vmatpush2.bf16.msra.mxu0 0
    %245 = vmatprep.subr.bf16.mxu0 0
    %246 = vmatpush2.bf16.msra.mxu0 0
    %247 = vmatprep.subr.bf16.mxu0 0
    %248 = vmatpush2.bf16.msra.mxu0 0
    %249 = vmatprep.mubr.bf16.mxu0 0
    %250 = vmatmul.mubr.bf16.gmra.mxu0 %v205
    %v251 = vpop.f32.mrf.mxu0
    %v252 = vadd.f32 %v144, %v251
    %v253 = vpop.f32.mrf.mxu0
    %v254 = vadd.f32 %v146, %v253
    %v255 = vpop.f32.mrf.mxu0
    %v256 = vpop.f32.mrf.mxu0
    %257 = vdwg.mxu0
    %258 = vmatprep.subr.bf16.mxu0 0
    %259 = vmatpush1.bf16.msra.mxu0 0
    %260 = vmatprep.subr.bf16.mxu0 0
    %261 = vmatpush1.bf16.msra.mxu0 0
    %262 = vmatprep.subr.bf16.mxu0 0
    %263 = vmatpush1.bf16.msra.mxu0 0
    %264 = vmatprep.subr.bf16.mxu0 0
    %265 = vmatpush1.bf16.msra.mxu0 0
    %266 = vmatprep.subr.bf16.mxu0 0
    %267 = vmatpush1.bf16.msra.mxu0 0
    %268 = vmatprep.subr.bf16.mxu0 0
    %269 = vmatpush1.bf16.msra.mxu0 0
    %270 = vmatprep.subr.bf16.mxu0 0
    %271 = vmatpush1.bf16.msra.mxu0 0
    %272 = vmatprep.subr.bf16.mxu0 0
    %273 = vmatpush1.bf16.msra.mxu0 %v215
    %274 = vmatprep.subr.bf16.mxu0 0
    %275 = vmatpush2.bf16.msra.mxu0 0
    %276 = vmatprep.subr.bf16.mxu0 0
    %277 = vmatpush2.bf16.msra.mxu0 0
    %278 = vmatprep.subr.bf16.mxu0 0
    %279 = vmatpush2.bf16.msra.mxu0 0
    %280 = vmatprep.subr.bf16.mxu0 0
    %281 = vmatpush2.bf16.msra.mxu0 0
    %282 = vmatprep.subr.bf16.mxu0 0
    %283 = vmatpush2.bf16.msra.mxu0 0
    %284 = vmatprep.subr.bf16.mxu0 0
    %285 = vmatpush2.bf16.msra.mxu0 0
    %286 = vmatprep.subr.bf16.mxu0 0
    %287 = vmatpush2.bf16.msra.mxu0 0
    %288 = vmatprep.subr.bf16.mxu0 0
    %289 = vmatpush2.bf16.msra.mxu0 0
    %290 = vmatprep.mubr.bf16.mxu0 0
    %291 = vmatmul.mubr.bf16.gmra.mxu0 %v205
    %v292 = vpop.f32.mrf.mxu0
    %v293 = vadd.f32 %v185, %v292
    %v294 = vpop.f32.mrf.mxu0
    %v295 = vpop.f32.mrf.mxu0
    %v296 = vpop.f32.mrf.mxu0
    %297 = vdwg.mxu0
    %v298 = vld [vmem:[%s4] sm:$0x7]
    %v300 = vlaneseq
    %v301 = vshrl.u32 %v300, 7
    %v302 = vsub.s32 0, %v301
    %v303 = vrot.slane %v298, %v302
    %v304 = vlaneseq
    %v305 = vshrl.u32 %v304, 7
    %v306 = vsub.s32 1, %v305
    %v307 = vrot.slane %v298, %v306
    %v308 = vlaneseq
    %v309 = vshrl.u32 %v308, 7
    %v310 = vsub.s32 2, %v309
    %v311 = vrot.slane %v298, %v310
    %v315 = vadd.f32 %v252, %v303
    %v316 = vadd.f32 %v254, %v307
    %v317 = vadd.f32 %v293, %v311
    %v318 = vmax.f32 %v315, 0.0
    %v319 = vmax.f32 %v316, 0.0
    %v320 = vmax.f32 %v317, 0.0
    %v321 = vpack.c.bf16 %v318, %v318
    %v322 = vpack.c.bf16 %v319, %v319
    %v323 = vpack.c.bf16 %v320, %v320
    %v324 = vld [vmem:[%s5] sm:$0xf]
    %v325 = vld [vmem:[%s5 + $0x4] sm:$0xf]
    %v326 = vld [vmem:[%s5 + $0x8] sm:$0xf]
    %v327 = vld [vmem:[%s5 + $0xc] sm:$0xf]
    %v328 = vld [vmem:[#allocation7] sm:$0x1]
    %v330 = vlaneseq
    %v331 = vshrl.u32 %v330, 7
    %v332 = vsub.s32 0, %v331
    %v333 = vrot.slane %v328, %v332
    %v339 = vunpack.c.l.b16 %v324
    %v340 = vunpack.c.l.b16 %v325
    %v341 = vunpack.c.l.b16 %v326
    %v342 = vunpack.c.l.b16 %v327
    %v343 = vpack.c.b16 %v340, %v339
    %v344 = vpack.c.b16 %v342, %v341
    %vm347 = vcmask 261120
    %v349 = vsel %vm347, %v321, 0
    %351 = vmatprep.subr.bf16.mxu0 0
    %352 = vmatpush1.bf16.msra.mxu0 0
    %353 = vmatprep.subr.bf16.mxu0 0
    %354 = vmatpush1.bf16.msra.mxu0 0
    %355 = vmatprep.subr.bf16.mxu0 0
    %356 = vmatpush1.bf16.msra.mxu0 0
    %357 = vmatprep.subr.bf16.mxu0 0
    %358 = vmatpush1.bf16.msra.mxu0 0
    %359 = vmatprep.subr.bf16.mxu0 0
    %360 = vmatpush1.bf16.msra.mxu0 0
    %361 = vmatprep.subr.bf16.mxu0 0
    %362 = vmatpush1.bf16.msra.mxu0 0
    %363 = vmatprep.subr.bf16.mxu0 0
    %364 = vmatpush1.bf16.msra.mxu0 %v344
    %365 = vmatprep.subr.bf16.mxu0 0
    %366 = vmatpush1.bf16.msra.mxu0 %v343
    %367 = vmatprep.subr.bf16.mxu0 0
    %368 = vmatpush2.bf16.msra.mxu0 0
    %369 = vmatprep.subr.bf16.mxu0 0
    %370 = vmatpush2.bf16.msra.mxu0 0
    %371 = vmatprep.subr.bf16.mxu0 0
    %372 = vmatpush2.bf16.msra.mxu0 0
    %373 = vmatprep.subr.bf16.mxu0 0
    %374 = vmatpush2.bf16.msra.mxu0 0
    %375 = vmatprep.subr.bf16.mxu0 0
    %376 = vmatpush2.bf16.msra.mxu0 0
    %377 = vmatprep.subr.bf16.mxu0 0
    %378 = vmatpush2.bf16.msra.mxu0 0
    %379 = vmatprep.subr.bf16.mxu0 0
    %380 = vmatpush2.bf16.msra.mxu0 0
    %381 = vmatprep.subr.bf16.mxu0 0
    %382 = vmatpush2.bf16.msra.mxu0 0
    %383 = vmatprep.mubr.bf16.mxu0 0
    %384 = vmatmul.mubr.bf16.gmra.mxu0 %v349
    %v385 = vpop.f32.mrf.mxu0
    %v386 = vadd.f32 %v333, %v385
    %v387 = vpop.f32.mrf.mxu0
    %v388 = vpop.f32.mrf.mxu0
    %v389 = vpop.f32.mrf.mxu0
    %390 = vdwg.mxu0
    %v391 = vmax.f32 %v386, 0.0
    %v392 = vpack.c.bf16 %v391, %v391
    %s393 = scalar_lea.vmem %s5, 16
    %v394 = vld [vmem:[%s393] sm:$0xf]
    %v395 = vld [vmem:[%s393 + $0x4] sm:$0xf]
    %v396 = vld [vmem:[%s393 + $0x8] sm:$0xf]
    %v397 = vld [vmem:[%s393 + $0xc] sm:$0xf]
    %399 = vrot.lane.b32.xlu0 %v321, 96
    %v400 = vpop.permute.xlu0 %399
    %v405 = vunpack.c.l.b16 %v394
    %v406 = vunpack.c.l.b16 %v395
    %v407 = vunpack.c.l.b16 %v396
    %v408 = vunpack.c.l.b16 %v397
    %v409 = vpack.c.b16 %v406, %v405
    %v410 = vpack.c.b16 %v408, %v407
    %413 = vrot.lane.b32.xlu0 %v333, 96
    %v414 = vpop.permute.xlu0 %413
    %v417 = vsel %vm347, %v400, 0
    %419 = vmatprep.subr.bf16.mxu0 0
    %420 = vmatpush1.bf16.msra.mxu0 0
    %421 = vmatprep.subr.bf16.mxu0 0
    %422 = vmatpush1.bf16.msra.mxu0 0
    %423 = vmatprep.subr.bf16.mxu0 0
    %424 = vmatpush1.bf16.msra.mxu0 0
    %425 = vmatprep.subr.bf16.mxu0 0
    %426 = vmatpush1.bf16.msra.mxu0 0
    %427 = vmatprep.subr.bf16.mxu0 0
    %428 = vmatpush1.bf16.msra.mxu0 0
    %429 = vmatprep.subr.bf16.mxu0 0
    %430 = vmatpush1.bf16.msra.mxu0 0
    %431 = vmatprep.subr.bf16.mxu0 0
    %432 = vmatpush1.bf16.msra.mxu0 %v410
    %433 = vmatprep.subr.bf16.mxu0 0
    %434 = vmatpush1.bf16.msra.mxu0 %v409
    %435 = vmatprep.subr.bf16.mxu0 0
    %436 = vmatpush2.bf16.msra.mxu0 0
    %437 = vmatprep.subr.bf16.mxu0 0
    %438 = vmatpush2.bf16.msra.mxu0 0
    %439 = vmatprep.subr.bf16.mxu0 0
    %440 = vmatpush2.bf16.msra.mxu0 0
    %441 = vmatprep.subr.bf16.mxu0 0
    %442 = vmatpush2.bf16.msra.mxu0 0
    %443 = vmatprep.subr.bf16.mxu0 0
    %444 = vmatpush2.bf16.msra.mxu0 0
    %445 = vmatprep.subr.bf16.mxu0 0
    %446 = vmatpush2.bf16.msra.mxu0 0
    %447 = vmatprep.subr.bf16.mxu0 0
    %448 = vmatpush2.bf16.msra.mxu0 0
    %449 = vmatprep.subr.bf16.mxu0 0
    %450 = vmatpush2.bf16.msra.mxu0 0
    %451 = vmatprep.mubr.bf16.mxu0 0
    %452 = vmatmul.mubr.bf16.gmra.mxu0 %v417
    %v453 = vpop.f32.mrf.mxu0
    %v454 = vadd.f32 %v414, %v453
    %v455 = vpop.f32.mrf.mxu0
    %v456 = vpop.f32.mrf.mxu0
    %v457 = vpop.f32.mrf.mxu0
    %458 = vdwg.mxu0
    %v459 = vmax.f32 %v454, 0.0
    %v460 = vpack.c.bf16 %v459, %v459
    %s461 = scalar_lea.vmem %s5, 32
    %v462 = vld [vmem:[%s461] sm:$0xf]
    %v463 = vld [vmem:[%s461 + $0x4] sm:$0xf]
    %v464 = vld [vmem:[%s461 + $0x8] sm:$0xf]
    %v465 = vld [vmem:[%s461 + $0xc] sm:$0xf]
    %466 = vrot.lane.b32.xlu0 %v321, 64
    %v467 = vpop.permute.xlu0 %466
    %v472 = vunpack.c.l.b16 %v462
    %v473 = vunpack.c.l.b16 %v463
    %v474 = vunpack.c.l.b16 %v464
    %v475 = vunpack.c.l.b16 %v465
    %v476 = vpack.c.b16 %v473, %v472
    %v477 = vpack.c.b16 %v475, %v474
    %480 = vrot.lane.b32.xlu0 %v333, 64
    %v481 = vpop.permute.xlu0 %480
    %v484 = vsel %vm347, %v467, 0
    %486 = vmatprep.subr.bf16.mxu0 0
    %487 = vmatpush1.bf16.msra.mxu0 0
    %488 = vmatprep.subr.bf16.mxu0 0
    %489 = vmatpush1.bf16.msra.mxu0 0
    %490 = vmatprep.subr.bf16.mxu0 0
    %491 = vmatpush1.bf16.msra.mxu0 0
    %492 = vmatprep.subr.bf16.mxu0 0
    %493 = vmatpush1.bf16.msra.mxu0 0
    %494 = vmatprep.subr.bf16.mxu0 0
    %495 = vmatpush1.bf16.msra.mxu0 0
    %496 = vmatprep.subr.bf16.mxu0 0
    %497 = vmatpush1.bf16.msra.mxu0 0
    %498 = vmatprep.subr.bf16.mxu0 0
    %499 = vmatpush1.bf16.msra.mxu0 %v477
    %500 = vmatprep.subr.bf16.mxu0 0
    %501 = vmatpush1.bf16.msra.mxu0 %v476
    %502 = vmatprep.subr.bf16.mxu0 0
    %503 = vmatpush2.bf16.msra.mxu0 0
    %504 = vmatprep.subr.bf16.mxu0 0
    %505 = vmatpush2.bf16.msra.mxu0 0
    %506 = vmatprep.subr.bf16.mxu0 0
    %507 = vmatpush2.bf16.msra.mxu0 0
    %508 = vmatprep.subr.bf16.mxu0 0
    %509 = vmatpush2.bf16.msra.mxu0 0
    %510 = vmatprep.subr.bf16.mxu0 0
    %511 = vmatpush2.bf16.msra.mxu0 0
    %512 = vmatprep.subr.bf16.mxu0 0
    %513 = vmatpush2.bf16.msra.mxu0 0
    %514 = vmatprep.subr.bf16.mxu0 0
    %515 = vmatpush2.bf16.msra.mxu0 0
    %516 = vmatprep.subr.bf16.mxu0 0
    %517 = vmatpush2.bf16.msra.mxu0 0
    %518 = vmatprep.mubr.bf16.mxu0 0
    %519 = vmatmul.mubr.bf16.gmra.mxu0 %v484
    %v520 = vpop.f32.mrf.mxu0
    %v521 = vadd.f32 %v481, %v520
    %v522 = vpop.f32.mrf.mxu0
    %v523 = vpop.f32.mrf.mxu0
    %v524 = vpop.f32.mrf.mxu0
    %525 = vdwg.mxu0
    %v526 = vmax.f32 %v521, 0.0
    %v527 = vpack.c.bf16 %v526, %v526
    %s528 = scalar_lea.vmem %s5, 48
    %v529 = vld [vmem:[%s528] sm:$0xf]
    %v530 = vld [vmem:[%s528 + $0x4] sm:$0xf]
    %v531 = vld [vmem:[%s528 + $0x8] sm:$0xf]
    %v532 = vld [vmem:[%s528 + $0xc] sm:$0xf]
    %533 = vrot.lane.b32.xlu0 %v321, 32
    %v534 = vpop.permute.xlu0 %533
    %v539 = vunpack.c.l.b16 %v529
    %v540 = vunpack.c.l.b16 %v530
    %v541 = vunpack.c.l.b16 %v531
    %v542 = vunpack.c.l.b16 %v532
    %v543 = vpack.c.b16 %v540, %v539
    %v544 = vpack.c.b16 %v542, %v541
    %547 = vrot.lane.b32.xlu0 %v333, 32
    %v548 = vpop.permute.xlu0 %547
    %v551 = vsel %vm347, %v534, 0
    %553 = vmatprep.subr.bf16.mxu0 0
    %554 = vmatpush1.bf16.msra.mxu0 0
    %555 = vmatprep.subr.bf16.mxu0 0
    %556 = vmatpush1.bf16.msra.mxu0 0
    %557 = vmatprep.subr.bf16.mxu0 0
    %558 = vmatpush1.bf16.msra.mxu0 0
    %559 = vmatprep.subr.bf16.mxu0 0
    %560 = vmatpush1.bf16.msra.mxu0 0
    %561 = vmatprep.subr.bf16.mxu0 0
    %562 = vmatpush1.bf16.msra.mxu0 0
    %563 = vmatprep.subr.bf16.mxu0 0
    %564 = vmatpush1.bf16.msra.mxu0 0
    %565 = vmatprep.subr.bf16.mxu0 0
    %566 = vmatpush1.bf16.msra.mxu0 %v544
    %567 = vmatprep.subr.bf16.mxu0 0
    %568 = vmatpush1.bf16.msra.mxu0 %v543
    %569 = vmatprep.subr.bf16.mxu0 0
    %570 = vmatpush2.bf16.msra.mxu0 0
    %571 = vmatprep.subr.bf16.mxu0 0
    %572 = vmatpush2.bf16.msra.mxu0 0
    %573 = vmatprep.subr.bf16.mxu0 0
    %574 = vmatpush2.bf16.msra.mxu0 0
    %575 = vmatprep.subr.bf16.mxu0 0
    %576 = vmatpush2.bf16.msra.mxu0 0
    %577 = vmatprep.subr.bf16.mxu0 0
    %578 = vmatpush2.bf16.msra.mxu0 0
    %579 = vmatprep.subr.bf16.mxu0 0
    %580 = vmatpush2.bf16.msra.mxu0 0
    %581 = vmatprep.subr.bf16.mxu0 0
    %582 = vmatpush2.bf16.msra.mxu0 0
    %583 = vmatprep.subr.bf16.mxu0 0
    %584 = vmatpush2.bf16.msra.mxu0 0
    %585 = vmatprep.mubr.bf16.mxu0 0
    %586 = vmatmul.mubr.bf16.gmra.mxu0 %v551
    %v587 = vpop.f32.mrf.mxu0
    %v588 = vadd.f32 %v548, %v587
    %v589 = vpop.f32.mrf.mxu0
    %v590 = vpop.f32.mrf.mxu0
    %v591 = vpop.f32.mrf.mxu0
    %592 = vdwg.mxu0
    %v593 = vmax.f32 %v588, 0.0
    %v594 = vpack.c.bf16 %v593, %v593
    %s595 = scalar_lea.vmem %s5, 64
    %v596 = vld [vmem:[%s595] sm:$0xf]
    %v597 = vld [vmem:[%s595 + $0x4] sm:$0xf]
    %v598 = vld [vmem:[%s595 + $0x8] sm:$0xf]
    %v599 = vld [vmem:[%s595 + $0xc] sm:$0xf]
    %v600 = vld [vmem:[#allocation7 + $0x1] sm:$0x1]
    %v602 = vlaneseq
    %v603 = vshrl.u32 %v602, 7
    %v604 = vsub.s32 0, %v603
    %v605 = vrot.slane %v600, %v604
    %v611 = vunpack.c.l.b16 %v596
    %v612 = vunpack.c.l.b16 %v597
    %v613 = vunpack.c.l.b16 %v598
    %v614 = vunpack.c.l.b16 %v599
    %v615 = vpack.c.b16 %v612, %v611
    %v616 = vpack.c.b16 %v614, %v613
    %v620 = vsel %vm347, %v322, 0
    %622 = vmatprep.subr.bf16.mxu0 0
    %623 = vmatpush1.bf16.msra.mxu0 0
    %624 = vmatprep.subr.bf16.mxu0 0
    %625 = vmatpush1.bf16.msra.mxu0 0
    %626 = vmatprep.subr.bf16.mxu0 0
    %627 = vmatpush1.bf16.msra.mxu0 0
    %628 = vmatprep.subr.bf16.mxu0 0
    %629 = vmatpush1.bf16.msra.mxu0 0
    %630 = vmatprep.subr.bf16.mxu0 0
    %631 = vmatpush1.bf16.msra.mxu0 0
    %632 = vmatprep.subr.bf16.mxu0 0
    %633 = vmatpush1.bf16.msra.mxu0 0
    %634 = vmatprep.subr.bf16.mxu0 0
    %635 = vmatpush1.bf16.msra.mxu0 %v616
    %636 = vmatprep.subr.bf16.mxu0 0
    %637 = vmatpush1.bf16.msra.mxu0 %v615
    %638 = vmatprep.subr.bf16.mxu0 0
    %639 = vmatpush2.bf16.msra.mxu0 0
    %640 = vmatprep.subr.bf16.mxu0 0
    %641 = vmatpush2.bf16.msra.mxu0 0
    %642 = vmatprep.subr.bf16.mxu0 0
    %643 = vmatpush2.bf16.msra.mxu0 0
    %644 = vmatprep.subr.bf16.mxu0 0
    %645 = vmatpush2.bf16.msra.mxu0 0
    %646 = vmatprep.subr.bf16.mxu0 0
    %647 = vmatpush2.bf16.msra.mxu0 0
    %648 = vmatprep.subr.bf16.mxu0 0
    %649 = vmatpush2.bf16.msra.mxu0 0
    %650 = vmatprep.subr.bf16.mxu0 0
    %651 = vmatpush2.bf16.msra.mxu0 0
    %652 = vmatprep.subr.bf16.mxu0 0
    %653 = vmatpush2.bf16.msra.mxu0 0
    %654 = vmatprep.mubr.bf16.mxu0 0
    %655 = vmatmul.mubr.bf16.gmra.mxu0 %v620
    %v656 = vpop.f32.mrf.mxu0
    %v657 = vadd.f32 %v605, %v656
    %v658 = vpop.f32.mrf.mxu0
    %v659 = vpop.f32.mrf.mxu0
    %v660 = vpop.f32.mrf.mxu0
    %661 = vdwg.mxu0
    %v662 = vmax.f32 %v657, 0.0
    %v663 = vpack.c.bf16 %v662, %v662
    %s664 = scalar_lea.vmem %s5, 80
    %v665 = vld [vmem:[%s664] sm:$0xf]
    %v666 = vld [vmem:[%s664 + $0x4] sm:$0xf]
    %v667 = vld [vmem:[%s664 + $0x8] sm:$0xf]
    %v668 = vld [vmem:[%s664 + $0xc] sm:$0xf]
    %670 = vrot.lane.b32.xlu0 %v322, 96
    %v671 = vpop.permute.xlu0 %670
    %v676 = vunpack.c.l.b16 %v665
    %v677 = vunpack.c.l.b16 %v666
    %v678 = vunpack.c.l.b16 %v667
    %v679 = vunpack.c.l.b16 %v668
    %v680 = vpack.c.b16 %v677, %v676
    %v681 = vpack.c.b16 %v679, %v678
    %684 = vrot.lane.b32.xlu0 %v605, 96
    %v685 = vpop.permute.xlu0 %684
    %v688 = vsel %vm347, %v671, 0
    %690 = vmatprep.subr.bf16.mxu0 0
    %691 = vmatpush1.bf16.msra.mxu0 0
    %692 = vmatprep.subr.bf16.mxu0 0
    %693 = vmatpush1.bf16.msra.mxu0 0
    %694 = vmatprep.subr.bf16.mxu0 0
    %695 = vmatpush1.bf16.msra.mxu0 0
    %696 = vmatprep.subr.bf16.mxu0 0
    %697 = vmatpush1.bf16.msra.mxu0 0
    %698 = vmatprep.subr.bf16.mxu0 0
    %699 = vmatpush1.bf16.msra.mxu0 0
    %700 = vmatprep.subr.bf16.mxu0 0
    %701 = vmatpush1.bf16.msra.mxu0 0
    %702 = vmatprep.subr.bf16.mxu0 0
    %703 = vmatpush1.bf16.msra.mxu0 %v681
    %704 = vmatprep.subr.bf16.mxu0 0
    %705 = vmatpush1.bf16.msra.mxu0 %v680
    %706 = vmatprep.subr.bf16.mxu0 0
    %707 = vmatpush2.bf16.msra.mxu0 0
    %708 = vmatprep.subr.bf16.mxu0 0
    %709 = vmatpush2.bf16.msra.mxu0 0
    %710 = vmatprep.subr.bf16.mxu0 0
    %711 = vmatpush2.bf16.msra.mxu0 0
    %712 = vmatprep.subr.bf16.mxu0 0
    %713 = vmatpush2.bf16.msra.mxu0 0
    %714 = vmatprep.subr.bf16.mxu0 0
    %715 = vmatpush2.bf16.msra.mxu0 0
    %716 = vmatprep.subr.bf16.mxu0 0
    %717 = vmatpush2.bf16.msra.mxu0 0
    %718 = vmatprep.subr.bf16.mxu0 0
    %719 = vmatpush2.bf16.msra.mxu0 0
    %720 = vmatprep.subr.bf16.mxu0 0
    %721 = vmatpush2.bf16.msra.mxu0 0
    %722 = vmatprep.mubr.bf16.mxu0 0
    %723 = vmatmul.mubr.bf16.gmra.mxu0 %v688
    %v724 = vpop.f32.mrf.mxu0
    %v725 = vadd.f32 %v685, %v724
    %v726 = vpop.f32.mrf.mxu0
    %v727 = vpop.f32.mrf.mxu0
    %v728 = vpop.f32.mrf.mxu0
    %729 = vdwg.mxu0
    %v730 = vmax.f32 %v725, 0.0
    %v731 = vpack.c.bf16 %v730, %v730
    %s732 = scalar_lea.vmem %s5, 96
    %v733 = vld [vmem:[%s732] sm:$0xf]
    %v734 = vld [vmem:[%s732 + $0x4] sm:$0xf]
    %v735 = vld [vmem:[%s732 + $0x8] sm:$0xf]
    %v736 = vld [vmem:[%s732 + $0xc] sm:$0xf]
    %737 = vrot.lane.b32.xlu0 %v322, 64
    %v738 = vpop.permute.xlu0 %737
    %v743 = vunpack.c.l.b16 %v733
    %v744 = vunpack.c.l.b16 %v734
    %v745 = vunpack.c.l.b16 %v735
    %v746 = vunpack.c.l.b16 %v736
    %v747 = vpack.c.b16 %v744, %v743
    %v748 = vpack.c.b16 %v746, %v745
    %751 = vrot.lane.b32.xlu0 %v605, 64
    %v752 = vpop.permute.xlu0 %751
    %v755 = vsel %vm347, %v738, 0
    %757 = vmatprep.subr.bf16.mxu0 0
    %758 = vmatpush1.bf16.msra.mxu0 0
    %759 = vmatprep.subr.bf16.mxu0 0
    %760 = vmatpush1.bf16.msra.mxu0 0
    %761 = vmatprep.subr.bf16.mxu0 0
    %762 = vmatpush1.bf16.msra.mxu0 0
    %763 = vmatprep.subr.bf16.mxu0 0
    %764 = vmatpush1.bf16.msra.mxu0 0
    %765 = vmatprep.subr.bf16.mxu0 0
    %766 = vmatpush1.bf16.msra.mxu0 0
    %767 = vmatprep.subr.bf16.mxu0 0
    %768 = vmatpush1.bf16.msra.mxu0 0
    %769 = vmatprep.subr.bf16.mxu0 0
    %770 = vmatpush1.bf16.msra.mxu0 %v748
    %771 = vmatprep.subr.bf16.mxu0 0
    %772 = vmatpush1.bf16.msra.mxu0 %v747
    %773 = vmatprep.subr.bf16.mxu0 0
    %774 = vmatpush2.bf16.msra.mxu0 0
    %775 = vmatprep.subr.bf16.mxu0 0
    %776 = vmatpush2.bf16.msra.mxu0 0
    %777 = vmatprep.subr.bf16.mxu0 0
    %778 = vmatpush2.bf16.msra.mxu0 0
    %779 = vmatprep.subr.bf16.mxu0 0
    %780 = vmatpush2.bf16.msra.mxu0 0
    %781 = vmatprep.subr.bf16.mxu0 0
    %782 = vmatpush2.bf16.msra.mxu0 0
    %783 = vmatprep.subr.bf16.mxu0 0
    %784 = vmatpush2.bf16.msra.mxu0 0
    %785 = vmatprep.subr.bf16.mxu0 0
    %786 = vmatpush2.bf16.msra.mxu0 0
    %787 = vmatprep.subr.bf16.mxu0 0
    %788 = vmatpush2.bf16.msra.mxu0 0
    %789 = vmatprep.mubr.bf16.mxu0 0
    %790 = vmatmul.mubr.bf16.gmra.mxu0 %v755
    %v791 = vpop.f32.mrf.mxu0
    %v792 = vadd.f32 %v752, %v791
    %v793 = vpop.f32.mrf.mxu0
    %v794 = vpop.f32.mrf.mxu0
    %v795 = vpop.f32.mrf.mxu0
    %796 = vdwg.mxu0
    %v797 = vmax.f32 %v792, 0.0
    %v798 = vpack.c.bf16 %v797, %v797
    %s799 = scalar_lea.vmem %s5, 112
    %v800 = vld [vmem:[%s799] sm:$0xf]
    %v801 = vld [vmem:[%s799 + $0x4] sm:$0xf]
    %v802 = vld [vmem:[%s799 + $0x8] sm:$0xf]
    %v803 = vld [vmem:[%s799 + $0xc] sm:$0xf]
    %804 = vrot.lane.b32.xlu0 %v322, 32
    %v805 = vpop.permute.xlu0 %804
    %v810 = vunpack.c.l.b16 %v800
    %v811 = vunpack.c.l.b16 %v801
    %v812 = vunpack.c.l.b16 %v802
    %v813 = vunpack.c.l.b16 %v803
    %v814 = vpack.c.b16 %v811, %v810
    %v815 = vpack.c.b16 %v813, %v812
    %818 = vrot.lane.b32.xlu0 %v605, 32
    %v819 = vpop.permute.xlu0 %818
    %v822 = vsel %vm347, %v805, 0
    %824 = vmatprep.subr.bf16.mxu0 0
    %825 = vmatpush1.bf16.msra.mxu0 0
    %826 = vmatprep.subr.bf16.mxu0 0
    %827 = vmatpush1.bf16.msra.mxu0 0
    %828 = vmatprep.subr.bf16.mxu0 0
    %829 = vmatpush1.bf16.msra.mxu0 0
    %830 = vmatprep.subr.bf16.mxu0 0
    %831 = vmatpush1.bf16.msra.mxu0 0
    %832 = vmatprep.subr.bf16.mxu0 0
    %833 = vmatpush1.bf16.msra.mxu0 0
    %834 = vmatprep.subr.bf16.mxu0 0
    %835 = vmatpush1.bf16.msra.mxu0 0
    %836 = vmatprep.subr.bf16.mxu0 0
    %837 = vmatpush1.bf16.msra.mxu0 %v815
    %838 = vmatprep.subr.bf16.mxu0 0
    %839 = vmatpush1.bf16.msra.mxu0 %v814
    %840 = vmatprep.subr.bf16.mxu0 0
    %841 = vmatpush2.bf16.msra.mxu0 0
    %842 = vmatprep.subr.bf16.mxu0 0
    %843 = vmatpush2.bf16.msra.mxu0 0
    %844 = vmatprep.subr.bf16.mxu0 0
    %845 = vmatpush2.bf16.msra.mxu0 0
    %846 = vmatprep.subr.bf16.mxu0 0
    %847 = vmatpush2.bf16.msra.mxu0 0
    %848 = vmatprep.subr.bf16.mxu0 0
    %849 = vmatpush2.bf16.msra.mxu0 0
    %850 = vmatprep.subr.bf16.mxu0 0
    %851 = vmatpush2.bf16.msra.mxu0 0
    %852 = vmatprep.subr.bf16.mxu0 0
    %853 = vmatpush2.bf16.msra.mxu0 0
    %854 = vmatprep.subr.bf16.mxu0 0
    %855 = vmatpush2.bf16.msra.mxu0 0
    %856 = vmatprep.mubr.bf16.mxu0 0
    %857 = vmatmul.mubr.bf16.gmra.mxu0 %v822
    %v858 = vpop.f32.mrf.mxu0
    %v859 = vadd.f32 %v819, %v858
    %v860 = vpop.f32.mrf.mxu0
    %v861 = vpop.f32.mrf.mxu0
    %v862 = vpop.f32.mrf.mxu0
    %863 = vdwg.mxu0
    %v864 = vmax.f32 %v859, 0.0
    %v865 = vpack.c.bf16 %v864, %v864
    %s866 = scalar_lea.vmem %s5, 128
    %v867 = vld [vmem:[%s866] sm:$0xf]
    %v868 = vld [vmem:[%s866 + $0x4] sm:$0xf]
    %v869 = vld [vmem:[%s866 + $0x8] sm:$0xf]
    %v870 = vld [vmem:[%s866 + $0xc] sm:$0xf]
    %v871 = vld [vmem:[#allocation7 + $0x2] sm:$0x1]
    %v873 = vlaneseq
    %v874 = vshrl.u32 %v873, 7
    %v875 = vsub.s32 0, %v874
    %v876 = vrot.slane %v871, %v875
    %v882 = vunpack.c.l.b16 %v867
    %v883 = vunpack.c.l.b16 %v868
    %v884 = vunpack.c.l.b16 %v869
    %v885 = vunpack.c.l.b16 %v870
    %v886 = vpack.c.b16 %v883, %v882
    %v887 = vpack.c.b16 %v885, %v884
    %v891 = vsel %vm347, %v323, 0
    %893 = vmatprep.subr.bf16.mxu0 0
    %894 = vmatpush1.bf16.msra.mxu0 0
    %895 = vmatprep.subr.bf16.mxu0 0
    %896 = vmatpush1.bf16.msra.mxu0 0
    %897 = vmatprep.subr.bf16.mxu0 0
    %898 = vmatpush1.bf16.msra.mxu0 0
    %899 = vmatprep.subr.bf16.mxu0 0
    %900 = vmatpush1.bf16.msra.mxu0 0
    %901 = vmatprep.subr.bf16.mxu0 0
    %902 = vmatpush1.bf16.msra.mxu0 0
    %903 = vmatprep.subr.bf16.mxu0 0
    %904 = vmatpush1.bf16.msra.mxu0 0
    %905 = vmatprep.subr.bf16.mxu0 0
    %906 = vmatpush1.bf16.msra.mxu0 %v887
    %907 = vmatprep.subr.bf16.mxu0 0
    %908 = vmatpush1.bf16.msra.mxu0 %v886
    %909 = vmatprep.subr.bf16.mxu0 0
    %910 = vmatpush2.bf16.msra.mxu0 0
    %911 = vmatprep.subr.bf16.mxu0 0
    %912 = vmatpush2.bf16.msra.mxu0 0
    %913 = vmatprep.subr.bf16.mxu0 0
    %914 = vmatpush2.bf16.msra.mxu0 0
    %915 = vmatprep.subr.bf16.mxu0 0
    %916 = vmatpush2.bf16.msra.mxu0 0
    %917 = vmatprep.subr.bf16.mxu0 0
    %918 = vmatpush2.bf16.msra.mxu0 0
    %919 = vmatprep.subr.bf16.mxu0 0
    %920 = vmatpush2.bf16.msra.mxu0 0
    %921 = vmatprep.subr.bf16.mxu0 0
    %922 = vmatpush2.bf16.msra.mxu0 0
    %923 = vmatprep.subr.bf16.mxu0 0
    %924 = vmatpush2.bf16.msra.mxu0 0
    %925 = vmatprep.mubr.bf16.mxu0 0
    %926 = vmatmul.mubr.bf16.gmra.mxu0 %v891
    %v927 = vpop.f32.mrf.mxu0
    %v928 = vadd.f32 %v876, %v927
    %v929 = vpop.f32.mrf.mxu0
    %v930 = vpop.f32.mrf.mxu0
    %v931 = vpop.f32.mrf.mxu0
    %932 = vdwg.mxu0
    %v933 = vmax.f32 %v928, 0.0
    %v934 = vpack.c.bf16 %v933, %v933
    %s935 = scalar_lea.vmem %s5, 144
    %v936 = vld [vmem:[%s935] sm:$0xf]
    %v937 = vld [vmem:[%s935 + $0x4] sm:$0xf]
    %v938 = vld [vmem:[%s935 + $0x8] sm:$0xf]
    %v939 = vld [vmem:[%s935 + $0xc] sm:$0xf]
    %941 = vrot.lane.b32.xlu0 %v323, 96
    %v942 = vpop.permute.xlu0 %941
    %v947 = vunpack.c.l.b16 %v936
    %v948 = vunpack.c.l.b16 %v937
    %v949 = vunpack.c.l.b16 %v938
    %v950 = vunpack.c.l.b16 %v939
    %v951 = vpack.c.b16 %v948, %v947
    %v952 = vpack.c.b16 %v950, %v949
    %955 = vrot.lane.b32.xlu0 %v876, 96
    %v956 = vpop.permute.xlu0 %955
    %v959 = vsel %vm347, %v942, 0
    %961 = vmatprep.subr.bf16.mxu0 0
    %962 = vmatpush1.bf16.msra.mxu0 0
    %963 = vmatprep.subr.bf16.mxu0 0
    %964 = vmatpush1.bf16.msra.mxu0 0
    %965 = vmatprep.subr.bf16.mxu0 0
    %966 = vmatpush1.bf16.msra.mxu0 0
    %967 = vmatprep.subr.bf16.mxu0 0
    %968 = vmatpush1.bf16.msra.mxu0 0
    %969 = vmatprep.subr.bf16.mxu0 0
    %970 = vmatpush1.bf16.msra.mxu0 0
    %971 = vmatprep.subr.bf16.mxu0 0
    %972 = vmatpush1.bf16.msra.mxu0 0
    %973 = vmatprep.subr.bf16.mxu0 0
    %974 = vmatpush1.bf16.msra.mxu0 %v952
    %975 = vmatprep.subr.bf16.mxu0 0
    %976 = vmatpush1.bf16.msra.mxu0 %v951
    %977 = vmatprep.subr.bf16.mxu0 0
    %978 = vmatpush2.bf16.msra.mxu0 0
    %979 = vmatprep.subr.bf16.mxu0 0
    %980 = vmatpush2.bf16.msra.mxu0 0
    %981 = vmatprep.subr.bf16.mxu0 0
    %982 = vmatpush2.bf16.msra.mxu0 0
    %983 = vmatprep.subr.bf16.mxu0 0
    %984 = vmatpush2.bf16.msra.mxu0 0
    %985 = vmatprep.subr.bf16.mxu0 0
    %986 = vmatpush2.bf16.msra.mxu0 0
    %987 = vmatprep.subr.bf16.mxu0 0
    %988 = vmatpush2.bf16.msra.mxu0 0
    %989 = vmatprep.subr.bf16.mxu0 0
    %990 = vmatpush2.bf16.msra.mxu0 0
    %991 = vmatprep.subr.bf16.mxu0 0
    %992 = vmatpush2.bf16.msra.mxu0 0
    %993 = vmatprep.mubr.bf16.mxu0 0
    %994 = vmatmul.mubr.bf16.gmra.mxu0 %v959
    %v995 = vpop.f32.mrf.mxu0
    %v996 = vadd.f32 %v956, %v995
    %v997 = vpop.f32.mrf.mxu0
    %v998 = vpop.f32.mrf.mxu0
    %v999 = vpop.f32.mrf.mxu0
    %1000 = vdwg.mxu0
    %v1001 = vmax.f32 %v996, 0.0
    %v1002 = vpack.c.bf16 %v1001, %v1001
    %1004 = vrot.lane.b32.xlu0 %v460, 32
    %v1005 = vpop.permute.xlu0 %1004
    %1007 = vrot.lane.b32.xlu0 %v527, 64
    %v1008 = vpop.permute.xlu0 %1007
    %1010 = vrot.lane.b32.xlu0 %v594, 96
    %v1011 = vpop.permute.xlu0 %1010
    %1013 = vrot.lane.b32.xlu0 %v731, 32
    %v1014 = vpop.permute.xlu0 %1013
    %1016 = vrot.lane.b32.xlu0 %v798, 64
    %v1017 = vpop.permute.xlu0 %1016
    %1019 = vrot.lane.b32.xlu0 %v865, 96
    %v1020 = vpop.permute.xlu0 %1019
    %1022 = vrot.lane.b32.xlu0 %v1002, 32
    %v1023 = vpop.permute.xlu0 %1022
    %v1026 = vsel %vm347, %v392, %v1005
    %vm1027 = vcmask 523264
    %v1029 = vsel %vm1027, %v1026, %v1008
    %vm1030 = vcmask 785408
    %v1032 = vsel %vm1030, %v1029, %v1011
    %v1036 = vsel %vm347, %v663, %v1014
    %v1038 = vsel %vm1027, %v1036, %v1017
    %v1040 = vsel %vm1030, %v1038, %v1020
    %v1044 = vsel %vm347, %v934, %v1023
    %v1045 = vld [vmem:[%s7] sm:$0xf]
    %v1046 = vld [vmem:[%s7 + $0x4] sm:$0xf]
    %v1047 = vld [vmem:[%s7 + $0x8] sm:$0xf]
    %v1048 = vld [vmem:[%s7 + $0xc] sm:$0xf]
    %v1049 = vld [vmem:[%s7 + $0x10] sm:$0xf]
    %v1050 = vld [vmem:[%s7 + $0x14] sm:$0xf]
    %v1051 = vld [vmem:[%s7 + $0x18] sm:$0xf]
    %v1052 = vld [vmem:[%s7 + $0x1c] sm:$0xf]
    %v1053 = vld [vmem:[%s7 + $0x20] sm:$0xf]
    %v1054 = vld [vmem:[%s7 + $0x24] sm:$0xf]
    %v1055 = vld [vmem:[%s7 + $0x28] sm:$0xf]
    %v1056 = vld [vmem:[%s7 + $0x2c] sm:$0xf]
    %v1057 = vld [vmem:[%s7 + $0x30] sm:$0xf]
    %v1058 = vld [vmem:[%s7 + $0x34] sm:$0xf]
    %v1059 = vld [vmem:[%s7 + $0x38] sm:$0xf]
    %v1060 = vld [vmem:[%s7 + $0x3c] sm:$0xf]
    %v1061 = vld [vmem:[%s7 + $0x40] sm:$0xf]
    %v1062 = vld [vmem:[%s7 + $0x44] sm:$0xf]
    %v1063 = vld [vmem:[%s7 + $0x48] sm:$0xf]
    %v1064 = vld [vmem:[%s7 + $0x4c] sm:$0xf]
    %v1065 = vld [vmem:[%s7 + $0x50] sm:$0xf]
    %v1066 = vld [vmem:[%s7 + $0x54] sm:$0xf]
    %v1067 = vld [vmem:[%s7 + $0x58] sm:$0xf]
    %v1068 = vld [vmem:[%s7 + $0x5c] sm:$0xf]
    %v1069 = vld [vmem:[%s7 + $0x60] sm:$0xf]
    %v1070 = vld [vmem:[%s7 + $0x64] sm:$0xf]
    %v1071 = vld [vmem:[%s7 + $0x68] sm:$0xf]
    %v1072 = vld [vmem:[%s7 + $0x6c] sm:$0xf]
    %v1073 = vld [vmem:[%s7 + $0x70] sm:$0xf]
    %v1074 = vld [vmem:[%s7 + $0x74] sm:$0xf]
    %v1075 = vld [vmem:[%s7 + $0x78] sm:$0xf]
    %v1076 = vld [vmem:[%s7 + $0x7c] sm:$0xf]
    %v1077 = vld [vmem:[%s7 + $0x80] sm:$0xf]
    %v1078 = vld [vmem:[%s7 + $0x84] sm:$0xf]
    %v1079 = vld [vmem:[%s7 + $0x88] sm:$0xf]
    %v1080 = vld [vmem:[%s7 + $0x8c] sm:$0xf]
    %v1081 = vld [vmem:[%s7 + $0x90] sm:$0xf]
    %v1082 = vld [vmem:[%s7 + $0x94] sm:$0xf]
    %v1083 = vld [vmem:[%s7 + $0x98] sm:$0xf]
    %v1084 = vld [vmem:[%s7 + $0x9c] sm:$0xf]
    %v1085 = vld [vmem:[%s8] sm:$0x1]
    %v1087 = vlaneseq
    %v1088 = vshrl.u32 %v1087, 7
    %v1089 = vsub.s32 0, %v1088
    %v1090 = vrot.slane %v1085, %v1089
    %v1132 = vunpack.c.l.b16 %v1045
    %v1133 = vunpack.c.l.b16 %v1046
    %v1134 = vunpack.c.l.b16 %v1047
    %v1135 = vunpack.c.l.b16 %v1048
    %v1136 = vunpack.c.l.b16 %v1049
    %v1137 = vunpack.c.l.b16 %v1050
    %v1138 = vunpack.c.l.b16 %v1051
    %v1139 = vunpack.c.l.b16 %v1052
    %v1140 = vunpack.c.l.b16 %v1053
    %v1141 = vunpack.c.l.b16 %v1054
    %v1142 = vunpack.c.l.b16 %v1055
    %v1143 = vunpack.c.l.b16 %v1056
    %v1144 = vunpack.c.l.b16 %v1057
    %v1145 = vunpack.c.l.b16 %v1058
    %v1146 = vunpack.c.l.b16 %v1059
    %v1147 = vunpack.c.l.b16 %v1060
    %v1148 = vunpack.c.l.b16 %v1061
    %v1149 = vunpack.c.l.b16 %v1062
    %v1150 = vunpack.c.l.b16 %v1063
    %v1151 = vunpack.c.l.b16 %v1064
    %v1152 = vunpack.c.l.b16 %v1065
    %v1153 = vunpack.c.l.b16 %v1066
    %v1154 = vunpack.c.l.b16 %v1067
    %v1155 = vunpack.c.l.b16 %v1068
    %v1156 = vunpack.c.l.b16 %v1069
    %v1157 = vunpack.c.l.b16 %v1070
    %v1158 = vunpack.c.l.b16 %v1071
    %v1159 = vunpack.c.l.b16 %v1072
    %v1160 = vunpack.c.l.b16 %v1073
    %v1161 = vunpack.c.l.b16 %v1074
    %v1162 = vunpack.c.l.b16 %v1075
    %v1163 = vunpack.c.l.b16 %v1076
    %v1164 = vunpack.c.l.b16 %v1077
    %v1165 = vunpack.c.l.b16 %v1078
    %v1166 = vunpack.c.l.b16 %v1079
    %v1167 = vunpack.c.l.b16 %v1080
    %v1168 = vunpack.c.l.b16 %v1081
    %v1169 = vunpack.c.l.b16 %v1082
    %v1170 = vunpack.c.l.b16 %v1083
    %v1171 = vunpack.c.l.b16 %v1084
    %v1172 = vpack.c.b16 %v1133, %v1132
    %v1173 = vpack.c.b16 %v1135, %v1134
    %v1174 = vpack.c.b16 %v1137, %v1136
    %v1175 = vpack.c.b16 %v1139, %v1138
    %v1176 = vpack.c.b16 %v1141, %v1140
    %v1177 = vpack.c.b16 %v1143, %v1142
    %v1178 = vpack.c.b16 %v1145, %v1144
    %v1179 = vpack.c.b16 %v1147, %v1146
    %v1180 = vpack.c.b16 %v1149, %v1148
    %v1181 = vpack.c.b16 %v1151, %v1150
    %v1182 = vpack.c.b16 %v1153, %v1152
    %v1183 = vpack.c.b16 %v1155, %v1154
    %v1184 = vpack.c.b16 %v1157, %v1156
    %v1185 = vpack.c.b16 %v1159, %v1158
    %v1186 = vpack.c.b16 %v1161, %v1160
    %v1187 = vpack.c.b16 %v1163, %v1162
    %v1188 = vpack.c.b16 %v1165, %v1164
    %v1189 = vpack.c.b16 %v1167, %v1166
    %v1190 = vpack.c.b16 %v1169, %v1168
    %v1191 = vpack.c.b16 %v1171, %v1170
    %v1212 = vsel %vm1027, %v1044, 0
    %1214 = vmatprep.subr.bf16.mxu0 0
    %1215 = vmatpush1.bf16.msra.mxu0 %v1179
    %1216 = vmatprep.subr.bf16.mxu0 0
    %1217 = vmatpush1.bf16.msra.mxu0 %v1178
    %1218 = vmatprep.subr.bf16.mxu0 0
    %1219 = vmatpush1.bf16.msra.mxu0 %v1177
    %1220 = vmatprep.subr.bf16.mxu0 0
    %1221 = vmatpush1.bf16.msra.mxu0 %v1176
    %1222 = vmatprep.subr.bf16.mxu0 0
    %1223 = vmatpush1.bf16.msra.mxu0 %v1175
    %1224 = vmatprep.subr.bf16.mxu0 0
    %1225 = vmatpush1.bf16.msra.mxu0 %v1174
    %1226 = vmatprep.subr.bf16.mxu0 0
    %1227 = vmatpush1.bf16.msra.mxu0 %v1173
    %1228 = vmatprep.subr.bf16.mxu0 0
    %1229 = vmatpush1.bf16.msra.mxu0 %v1172
    %1230 = vmatprep.subr.bf16.mxu0 0
    %1231 = vmatpush2.bf16.msra.mxu0 %v1187
    %1232 = vmatprep.subr.bf16.mxu0 0
    %1233 = vmatpush2.bf16.msra.mxu0 %v1186
    %1234 = vmatprep.subr.bf16.mxu0 0
    %1235 = vmatpush2.bf16.msra.mxu0 %v1185
    %1236 = vmatprep.subr.bf16.mxu0 0
    %1237 = vmatpush2.bf16.msra.mxu0 %v1184
    %1238 = vmatprep.subr.bf16.mxu0 0
    %1239 = vmatpush2.bf16.msra.mxu0 %v1183
    %1240 = vmatprep.subr.bf16.mxu0 0
    %1241 = vmatpush2.bf16.msra.mxu0 %v1182
    %1242 = vmatprep.subr.bf16.mxu0 0
    %1243 = vmatpush2.bf16.msra.mxu0 %v1181
    %1244 = vmatprep.subr.bf16.mxu0 0
    %1245 = vmatpush2.bf16.msra.mxu0 %v1180
    %1246 = vmatprep.mubr.bf16.mxu0 %v1040
    %1247 = vmatmul.mubr.bf16.gmra.mxu0 %v1032
    %v1248 = vpop.f32.mrf.mxu0
    %v1249 = vadd.f32 %v1090, %v1248
    %v1250 = vpop.f32.mrf.mxu0
    %v1251 = vpop.f32.mrf.mxu0
    %v1252 = vpop.f32.mrf.mxu0
    %1253 = vdwg.mxu0
    %1254 = vmatprep.subr.bf16.mxu0 0
    %1255 = vmatpush1.bf16.msra.mxu0 0
    %1256 = vmatprep.subr.bf16.mxu0 0
    %1257 = vmatpush1.bf16.msra.mxu0 0
    %1258 = vmatprep.subr.bf16.mxu0 0
    %1259 = vmatpush1.bf16.msra.mxu0 0
    %1260 = vmatprep.subr.bf16.mxu0 0
    %1261 = vmatpush1.bf16.msra.mxu0 0
    %1262 = vmatprep.subr.bf16.mxu0 0
    %1263 = vmatpush1.bf16.msra.mxu0 %v1191
    %1264 = vmatprep.subr.bf16.mxu0 0
    %1265 = vmatpush1.bf16.msra.mxu0 %v1190
    %1266 = vmatprep.subr.bf16.mxu0 0
    %1267 = vmatpush1.bf16.msra.mxu0 %v1189
    %1268 = vmatprep.subr.bf16.mxu0 0
    %1269 = vmatpush1.bf16.msra.mxu0 %v1188
    %1270 = vmatprep.subr.bf16.mxu0 0
    %1271 = vmatpush2.bf16.msra.mxu0 0
    %1272 = vmatprep.subr.bf16.mxu0 0
    %1273 = vmatpush2.bf16.msra.mxu0 0
    %1274 = vmatprep.subr.bf16.mxu0 0
    %1275 = vmatpush2.bf16.msra.mxu0 0
    %1276 = vmatprep.subr.bf16.mxu0 0
    %1277 = vmatpush2.bf16.msra.mxu0 0
    %1278 = vmatprep.subr.bf16.mxu0 0
    %1279 = vmatpush2.bf16.msra.mxu0 0
    %1280 = vmatprep.subr.bf16.mxu0 0
    %1281 = vmatpush2.bf16.msra.mxu0 0
    %1282 = vmatprep.subr.bf16.mxu0 0
    %1283 = vmatpush2.bf16.msra.mxu0 0
    %1284 = vmatprep.subr.bf16.mxu0 0
    %1285 = vmatpush2.bf16.msra.mxu0 0
    %1286 = vmatprep.mubr.bf16.mxu0 0
    %1287 = vmatmul.mubr.bf16.gmra.mxu0 %v1212
    %v1288 = vpop.f32.mrf.mxu0
    %v1289 = vadd.f32 %v1249, %v1288
    %v1290 = vpop.f32.mrf.mxu0
    %v1291 = vpop.f32.mrf.mxu0
    %v1292 = vpop.f32.mrf.mxu0
    %1293 = vdwg.mxu0
    %vm1294 = vcmask 74752
    %1295 = vst.msk [vmem:[#allocation8] sm:$0x3] %vm1294, %v1289
    // Predicated region
    $region50: #{tpu_custom_call.1} parent=1 // pred_check
      _
    $region51: #{tpu_custom_call.1} parent=1 // pred_check_branch
      %1297 = sbr.rel (0) target = $region53
    $region52: #{tpu_custom_call.1} parent=1 // pred_region
      %s1299 = ssub.s32 32, 32
      %1300 = vsyncadd [#allocation4], %s1299
      %s1302 = sshll.u32 [#allocation8], 4
      %s1303 = int_to_ptr.vmem [resolvable:$true] %s1302
      %1305 = dma.vmem_to_hbm [thread:$0]  %s1303, 32, %s9, [#allocation4]
    $region53: #{tpu_custom_call.1} parent=1 // pred_fallthru
      _
    // Predicated region
    $region54: #{tpu_custom_call.1} parent=1 // pred_check
      _
    $region55: #{tpu_custom_call.1} parent=1 // pred_check_branch
      %1307 = sbr.rel (0) target = $region57
    $region56: #{tpu_custom_call.1} parent=1 // pred_region
      %1308 = dma.done [#allocation4], 32
    $region57: #{tpu_custom_call.1} parent=1 // pred_fallthru
      _
    %1309 = vsyncpa [#allocation3], 1
    %1310 = vsyncpa [#allocation6], 1
    %1311 = vsyncpa [#allocation4], 1

</llo_original>
